<compile_context>
chip_gen: v7x
topology: tpu7x:2x2x1
jax: 0.10.0
libtpu: 0.0.40
codegen_flags: <defaults>
</compile_context>

<pallas_src>
import jax
import jax.numpy as jnp
import numpy as np
from jax.experimental import pallas as pl
from jax.experimental.pallas import tpu as pltpu


def _rbf_attn_kernel(mask_q_ref, mask_k_ref, q_ref, k_ref, v_ref, o_ref, acc_ref):
    # Blocks: mask_q (1,1,TQ), mask_k (1,1,TKV), q/o (1,1,TQ,P), k/v (1,1,TKV,P)
    # Scratch: acc (TQ,P) f32, resident across the kv axis.
    kv = pl.program_id(3)

    @pl.when(kv == 0)
    def _():
        acc_ref[...] = jnp.zeros_like(acc_ref)

    q = q_ref[0, 0]            # [TQ, P]  f32
    k = k_ref[0, 0]            # [TKV, P] f32
    v = v_ref[0, 0]            # [TKV, P] f32
    m_q = mask_q_ref[0, 0]     # [TQ]
    m_k = mask_k_ref[0, 0]     # [TKV]

    p_dim = q.shape[-1]
    dn = jnp.float32(p_dim) ** jnp.float32(-0.25)

    # Masked / normalized operands (f32 for the diag terms, bf16 for the MXU).
    qn = q * (m_q[:, None] * dn)                                 # [TQ, P]
    kn = k * (m_k[:, None] * dn)                                 # [TKV, P]

    # Per-key scale b_j = exp(-diag_K_j) * m_j, folded into V (TKV x P work
    # instead of TQ x TKV).  Binary mask => identical to the reference's
    # -1e9*(1-m) additive bias (exp underflows to exactly 0).
    diag_k = 0.5 * jnp.sum(kn * kn, axis=-1, keepdims=True)      # [TKV, 1]
    b = jnp.exp(-diag_k) * m_k[:, None]                          # [TKV, 1]
    vb = (v * b).astype(jnp.bfloat16)                            # [TKV, P]

    # Score core on the MXU: bf16 operands, f32 accumulate.
    s = jnp.dot(qn.astype(jnp.bfloat16), kn.astype(jnp.bfloat16).T,
                preferred_element_type=jnp.float32)              # [TQ, TKV]

    # Dominant cost: N^2 transcendentals on the EUP.
    # TODO(synk): on v6e/v7x a bf16 exp roughly doubles EUP throughput; kept
    # f32 here for accuracy and because v5e's EUP has no bf16 path.
    p = jnp.exp(s)

    acc_ref[...] += jnp.dot(p.astype(jnp.bfloat16), vb,
                            preferred_element_type=jnp.float32)  # [TQ, P]

    @pl.when(kv == pl.num_programs(3) - 1)
    def _():
        # Per-query scale a_i = exp(-diag_Q_i), applied once at writeback.
        diag_q = 0.5 * jnp.sum(qn * qn, axis=-1, keepdims=True)  # [TQ, 1]
        a = jnp.exp(-diag_q)                                     # [TQ, 1]
        # TODO(synk): attention dropout (p=0.0 here) would need pltpu.prng_* for p>0.
        o_ref[0, 0] = (a * acc_ref[...]).astype(o_ref.dtype)


def _fit_tile(n, t):
    """Largest tile <= t that divides n (falls back by halving, then to n)."""
    t = min(t, n)
    while n % t != 0:
        t //= 2
    return max(t, 1)


def softmax_attention_rbf(Q, K, V, mask, *, tq=256, tkv=256):
    """Q,K,V: [B,H,N,P] float32; mask: [B,N] float32 (binary). Returns [B,H,N,P].

    Default tiles (256,256) keep the score tile at 256 KiB f32, safely inside
    the default scoped-VMEM budget on v5e/v6e/v7x; on v6e/v7x they can be grown
    (with vmem_limit_bytes) to amortize per-step overhead further.
    """
    B, H, N, P = Q.shape
    tq = _fit_tile(N, tq)
    tkv = _fit_tile(N, tkv)
    grid = (B, H, N // tq, N // tkv)

    # [B,1,N]: size-1 sublane dim, mask positions on lanes.
    mask3 = mask.reshape(B, 1, N)

    q_spec = pl.BlockSpec((1, 1, tq, P), lambda b, h, qi, ki: (b, h, qi, 0))
    k_spec = pl.BlockSpec((1, 1, tkv, P), lambda b, h, qi, ki: (b, h, ki, 0))
    v_spec = pl.BlockSpec((1, 1, tkv, P), lambda b, h, qi, ki: (b, h, ki, 0))
    mq_spec = pl.BlockSpec((1, 1, tq), lambda b, h, qi, ki: (b, 0, qi))
    mk_spec = pl.BlockSpec((1, 1, tkv), lambda b, h, qi, ki: (b, 0, ki))
    o_spec = pl.BlockSpec((1, 1, tq, P), lambda b, h, qi, ki: (b, h, qi, 0))

    cost = pl.CostEstimate(
        flops=4 * B * H * N * N * P,             # two matmuls
        transcendentals=B * H * N * N,           # the dominant exp
        bytes_accessed=4 * (4 * B * H * N * P + 2 * B * N),
    )

    return pl.pallas_call(
        _rbf_attn_kernel,
        out_shape=jax.ShapeDtypeStruct((B, H, N, P), Q.dtype),
        grid_spec=pltpu.PrefetchScalarGridSpec(
            num_scalar_prefetch=0,
            grid=grid,
            in_specs=[mq_spec, mk_spec, q_spec, k_spec, v_spec],
            out_specs=o_spec,
            scratch_shapes=[pltpu.VMEM((tq, P), jnp.float32)],
        ),
        compiler_params=pltpu.CompilerParams(
            dimension_semantics=("parallel", "parallel", "parallel", "arbitrary"),
        ),
        cost_estimate=cost,
    )(mask3, mask3, Q, K, V)


def _reference(Q, K, V, mask):
    """Faithful f32 reference of the PyTorch module."""
    B, H, N, P = Q.shape
    dn = P ** (-0.25)
    Qn = Q * (mask[:, None, :, None] * dn)
    Kn = K * (mask[:, None, :, None] * dn)
    diag_Q = 0.5 * jnp.sum(Qn * Qn, -1)[..., :, None]
    diag_K = 0.5 * jnp.sum(Kn * Kn, -1)[..., None, :]
    product = (jnp.einsum('bhnp,bhmp->bhnm', Qn, Kn,
                          precision=jax.lax.Precision.HIGHEST)
               - diag_Q - diag_K - 1e9 * (1.0 - mask[:, None, None, :]))
    attn = jnp.exp(product)
    return jnp.matmul(attn, V, precision=jax.lax.Precision.HIGHEST)


if __name__ == "__main__":
    # Small shapes consistent with the module: B=2, H=2, seq N=512, head_dim P=32.
    # N=512 with 256-wide tiles exercises the tiled kv accumulation path.
    B, H, N, P = 2, 2, 512, 32
    key = jax.random.PRNGKey(0)
    kq, kk, kv = jax.random.split(key, 3)
    Q = jax.random.normal(kq, (B, H, N, P), dtype=jnp.float32)
    K = jax.random.normal(kk, (B, H, N, P), dtype=jnp.float32)
    V = jax.random.normal(kv, (B, H, N, P), dtype=jnp.float32)
    # Deterministic binary mask: last 64 positions of batch 1 are padding.
    mask = jnp.ones((B, N), dtype=jnp.float32)
    mask = mask.at[1, -64:].set(0.0)

    out = softmax_attention_rbf(Q, K, V, mask)
    out = jax.block_until_ready(out)

    ref = _reference(Q, K, V, mask)
    # Tolerance loosened vs the pure-f32 version: MXU operands (Qn/Kn and the
    # exp output / V*b) are bf16 with f32 accumulation, per the perf review.
    np.testing.assert_allclose(np.asarray(out), np.asarray(ref),
                               rtol=5e-2, atol=5e-2)
    print("KERNEL_OK")
</pallas_src>

<mosaic_0001>
module attributes {stable_mosaic.version = 11 : i64} {
  func.func @_rbf_attn_kernel(%arg0: i32, %arg1: i32, %arg2: i32, %arg3: i32, %arg4: memref<1x1x256xf32, #tpu.memory_space<vmem>>, %arg5: memref<1x1x256xf32, #tpu.memory_space<vmem>>, %arg6: memref<1x1x256x32xf32, #tpu.memory_space<vmem>>, %arg7: memref<1x1x256x32xf32, #tpu.memory_space<vmem>>, %arg8: memref<1x1x256x32xf32, #tpu.memory_space<vmem>>, %arg9: memref<1x1x256x32xf32, #tpu.memory_space<vmem>>, %arg10: memref<256x32xf32, #tpu.memory_space<vmem>>) attributes {dimension_semantics = [#tpu.dimension_semantics<parallel>, #tpu.dimension_semantics<parallel>, #tpu.dimension_semantics<parallel>, #tpu.dimension_semantics<arbitrary>], iteration_bounds = array<i64: 2, 2, 2, 2>, scalar_prefetch = 0 : i64, scratch_operands = 1 : i64, tpu.core_type = #tpu.core_type<tc>, window_params = [{transform_indices = @transform_0, window_bounds = array<i64: 1, 1, 256>}, {transform_indices = @transform_1, window_bounds = array<i64: 1, 1, 256>}, {transform_indices = @transform_2, window_bounds = array<i64: 1, 1, 256, 32>}, {transform_indices = @transform_3, window_bounds = array<i64: 1, 1, 256, 32>}, {transform_indices = @transform_4, window_bounds = array<i64: 1, 1, 256, 32>}, {transform_indices = @transform_5, window_bounds = array<i64: 1, 1, 256, 32>}]} {
    %c0_i32 = arith.constant 0 : i32
    %0 = arith.cmpi eq, %arg3, %c0_i32 : i32
    %1 = arith.extui %0 : i1 to i32
    %c0_i32_0 = arith.constant 0 : i32
    %2 = arith.cmpi ne, %1, %c0_i32_0 : i32
    scf.if %2 {
      %cst_29 = arith.constant 0.000000e+00 : f32
      %50 = vector.broadcast %cst_29 : f32 to vector<256x32xf32>
      %c0_30 = arith.constant 0 : index
      %c0_31 = arith.constant 0 : index
      %51 = vector.load %arg10[%c0_30, %c0_31] : memref<256x32xf32, #tpu.memory_space<vmem>>, vector<256x32xf32>
      tpu.vector_store %arg10[%c0_30, %c0_31], %50 {strides = array<i32>} : memref<256x32xf32, #tpu.memory_space<vmem>>, vector<256x32xf32>,
    } else {
    }
    %c0 = arith.constant 0 : index
    %c0_1 = arith.constant 0 : index
    %c0_2 = arith.constant 0 : index
    %c0_3 = arith.constant 0 : index
    %3 = vector.load %arg6[%c0, %c0_1, %c0_2, %c0_3] : memref<1x1x256x32xf32, #tpu.memory_space<vmem>>, vector<1x1x256x32xf32>
    %4 = vector.shape_cast %3 : vector<1x1x256x32xf32> to vector<256x32xf32>
    %c0_4 = arith.constant 0 : index
    %c0_5 = arith.constant 0 : index
    %c0_6 = arith.constant 0 : index
    %c0_7 = arith.constant 0 : index
    %5 = vector.load %arg7[%c0_4, %c0_5, %c0_6, %c0_7] : memref<1x1x256x32xf32, #tpu.memory_space<vmem>>, vector<1x1x256x32xf32>
    %6 = vector.shape_cast %5 : vector<1x1x256x32xf32> to vector<256x32xf32>
    %c0_8 = arith.constant 0 : index
    %c0_9 = arith.constant 0 : index
    %c0_10 = arith.constant 0 : index
    %c0_11 = arith.constant 0 : index
    %7 = vector.load %arg8[%c0_8, %c0_9, %c0_10, %c0_11] : memref<1x1x256x32xf32, #tpu.memory_space<vmem>>, vector<1x1x256x32xf32>
    %8 = vector.shape_cast %7 : vector<1x1x256x32xf32> to vector<256x32xf32>
    %c0_12 = arith.constant 0 : index
    %c0_13 = arith.constant 0 : index
    %c0_14 = arith.constant 0 : index
    %9 = vector.load %arg4[%c0_12, %c0_13, %c0_14] : memref<1x1x256xf32, #tpu.memory_space<vmem>>, vector<1x1x256xf32>
    %10 = vector.shape_cast %9 : vector<1x1x256xf32> to vector<256xf32>
    %c0_15 = arith.constant 0 : index
    %c0_16 = arith.constant 0 : index
    %c0_17 = arith.constant 0 : index
    %11 = vector.load %arg5[%c0_15, %c0_16, %c0_17] : memref<1x1x256xf32, #tpu.memory_space<vmem>>, vector<1x1x256xf32>
    %12 = vector.shape_cast %11 : vector<1x1x256xf32> to vector<256xf32>
    %cst = arith.constant 3.200000e+01 : f32
    %cst_18 = arith.constant -2.500000e-01 : f32
    %13 = math.powf %cst, %cst_18 : f32
    %14 = vector.shape_cast %10 : vector<256xf32> to vector<256x1xf32>
    %15 = vector.broadcast %13 : f32 to vector<256x1xf32>
    %16 = arith.mulf %14, %15 : vector<256x1xf32>
    %17 = vector.broadcast %16 : vector<256x1xf32> to vector<256x32xf32>
    %18 = arith.mulf %4, %17 : vector<256x32xf32>
    %19 = vector.shape_cast %12 : vector<256xf32> to vector<256x1xf32>
    %20 = vector.broadcast %13 : f32 to vector<256x1xf32>
    %21 = arith.mulf %19, %20 : vector<256x1xf32>
    %22 = vector.broadcast %21 : vector<256x1xf32> to vector<256x32xf32>
    %23 = arith.mulf %6, %22 : vector<256x32xf32>
    %24 = arith.mulf %23, %23 : vector<256x32xf32>
    %cst_19 = arith.constant dense<0.000000e+00> : vector<256xf32>
    %25 = vector.multi_reduction <add>, %24, %cst_19 [1] : vector<256x32xf32> to vector<256xf32>
    %26 = vector.shape_cast %25 : vector<256xf32> to vector<256x1xf32>
    %cst_20 = arith.constant 5.000000e-01 : f32
    %27 = vector.broadcast %cst_20 : f32 to vector<256x1xf32>
    %28 = arith.mulf %27, %26 : vector<256x1xf32>
    %cst_21 = arith.constant 0.000000e+00 : f32
    %29 = vector.broadcast %cst_21 : f32 to vector<256x1xf32>
    %30 = arith.subf %29, %28 : vector<256x1xf32>
    %31 = math.exp %30 : vector<256x1xf32>
    %32 = vector.shape_cast %12 : vector<256xf32> to vector<256x1xf32>
    %33 = arith.mulf %31, %32 : vector<256x1xf32>
    %34 = vector.broadcast %33 : vector<256x1xf32> to vector<256x32xf32>
    %35 = arith.mulf %8, %34 : vector<256x32xf32>
    %36 = arith.truncf %35 : vector<256x32xf32> to vector<256x32xbf16>
    %37 = arith.truncf %18 : vector<256x32xf32> to vector<256x32xbf16>
    %38 = arith.truncf %23 : vector<256x32xf32> to vector<256x32xbf16>
    %39 = tpu.transpose %38, [1, 0] : vector<256x32xbf16> -> vector<32x256xbf16>
    %cst_22 = arith.constant dense<0.000000e+00> : vector<256x256xf32>
    %40 = tpu.matmul %37, %39, %cst_22 {dimension_numbers = #tpu.dot_dimension_numbers<[1], [0], [0], [1], [0, 0, 1, 1], [], []>} : vector<256x32xbf16>, vector<32x256xbf16>, vector<256x256xf32> -> vector<256x256xf32>
    %41 = math.exp %40 : vector<256x256xf32>
    %c0_23 = arith.constant 0 : index
    %c0_24 = arith.constant 0 : index
    %42 = vector.load %arg10[%c0_23, %c0_24] : memref<256x32xf32, #tpu.memory_space<vmem>>, vector<256x32xf32>
    %43 = arith.truncf %41 : vector<256x256xf32> to vector<256x256xbf16>
    %cst_25 = arith.constant dense<0.000000e+00> : vector<256x32xf32>
    %44 = tpu.matmul %43, %36, %cst_25 {dimension_numbers = #tpu.dot_dimension_numbers<[1], [0], [0], [1], [0, 0, 1, 1], [], []>} : vector<256x256xbf16>, vector<256x32xbf16>, vector<256x32xf32> -> vector<256x32xf32>
    %45 = arith.addf %42, %44 : vector<256x32xf32>
    %c0_26 = arith.constant 0 : index
    %c0_27 = arith.constant 0 : index
    %46 = vector.load %arg10[%c0_26, %c0_27] : memref<256x32xf32, #tpu.memory_space<vmem>>, vector<256x32xf32>
    tpu.vector_store %arg10[%c0_26, %c0_27], %45 {strides = array<i32>} : memref<256x32xf32, #tpu.memory_space<vmem>>, vector<256x32xf32>,
    %c1_i32 = arith.constant 1 : i32
    %47 = arith.cmpi eq, %arg3, %c1_i32 : i32
    %48 = arith.extui %47 : i1 to i32
    %c0_i32_28 = arith.constant 0 : i32
    %49 = arith.cmpi ne, %48, %c0_i32_28 : i32
    scf.if %49 {
      %50 = arith.mulf %18, %18 : vector<256x32xf32>
      %cst_29 = arith.constant dense<0.000000e+00> : vector<256xf32>
      %51 = vector.multi_reduction <add>, %50, %cst_29 [1] : vector<256x32xf32> to vector<256xf32>
      %52 = vector.shape_cast %51 : vector<256xf32> to vector<256x1xf32>
      %cst_30 = arith.constant 5.000000e-01 : f32
      %53 = vector.broadcast %cst_30 : f32 to vector<256x1xf32>
      %54 = arith.mulf %53, %52 : vector<256x1xf32>
      %cst_31 = arith.constant 0.000000e+00 : f32
      %55 = vector.broadcast %cst_31 : f32 to vector<256x1xf32>
      %56 = arith.subf %55, %54 : vector<256x1xf32>
      %57 = math.exp %56 : vector<256x1xf32>
      %c0_32 = arith.constant 0 : index
      %c0_33 = arith.constant 0 : index
      %58 = vector.load %arg10[%c0_32, %c0_33] : memref<256x32xf32, #tpu.memory_space<vmem>>, vector<256x32xf32>
      %59 = vector.broadcast %57 : vector<256x1xf32> to vector<256x32xf32>
      %60 = arith.mulf %59, %58 : vector<256x32xf32>
      %c0_34 = arith.constant 0 : index
      %c0_35 = arith.constant 0 : index
      %c0_36 = arith.constant 0 : index
      %c0_37 = arith.constant 0 : index
      %61 = vector.load %arg9[%c0_34, %c0_35, %c0_36, %c0_37] : memref<1x1x256x32xf32, #tpu.memory_space<vmem>>, vector<1x1x256x32xf32>
      %62 = vector.shape_cast %61 : vector<1x1x256x32xf32> to vector<256x32xf32>
      %63 = vector.shape_cast %60 : vector<256x32xf32> to vector<1x1x256x32xf32>
      tpu.vector_store %arg9[%c0_34, %c0_35, %c0_36, %c0_37], %63 {strides = array<i32>} : memref<1x1x256x32xf32, #tpu.memory_space<vmem>>, vector<1x1x256x32xf32>,
    } else {
    }
    return
  }
  func.func @transform_0(%arg0: i32, %arg1: i32, %arg2: i32, %arg3: i32) -> (i32, i32, i32) {
    %c0_i32 = arith.constant 0 : i32
    %c0_i32_0 = arith.constant 0 : i32
    return %arg0, %c0_i32, %arg2 : i32, i32, i32
  }
  func.func @transform_1(%arg0: i32, %arg1: i32, %arg2: i32, %arg3: i32) -> (i32, i32, i32) {
    %c0_i32 = arith.constant 0 : i32
    %c0_i32_0 = arith.constant 0 : i32
    return %arg0, %c0_i32, %arg3 : i32, i32, i32
  }
  func.func @transform_2(%arg0: i32, %arg1: i32, %arg2: i32, %arg3: i32) -> (i32, i32, i32, i32) {
    %c0_i32 = arith.constant 0 : i32
    %c0_i32_0 = arith.constant 0 : i32
    return %arg0, %arg1, %arg2, %c0_i32 : i32, i32, i32, i32
  }
  func.func @transform_3(%arg0: i32, %arg1: i32, %arg2: i32, %arg3: i32) -> (i32, i32, i32, i32) {
    %c0_i32 = arith.constant 0 : i32
    %c0_i32_0 = arith.constant 0 : i32
    return %arg0, %arg1, %arg3, %c0_i32 : i32, i32, i32, i32
  }
  func.func @transform_4(%arg0: i32, %arg1: i32, %arg2: i32, %arg3: i32) -> (i32, i32, i32, i32) {
    %c0_i32 = arith.constant 0 : i32
    %c0_i32_0 = arith.constant 0 : i32
    return %arg0, %arg1, %arg3, %c0_i32 : i32, i32, i32, i32
  }
  func.func @transform_5(%arg0: i32, %arg1: i32, %arg2: i32, %arg3: i32) -> (i32, i32, i32, i32) {
    %c0_i32 = arith.constant 0 : i32
    %c0_i32_0 = arith.constant 0 : i32
    return %arg0, %arg1, %arg2, %c0_i32 : i32, i32, i32, i32
  }
}

</mosaic_0001>

<llo_original>
// kernel: tpu_custom_call.1
$region0: #{tpu_custom_call.1}
  #allocation0 [shape = 'u32[]', space=smem, size = 0x4, offset = 0x4, fixed_abs, tag = 'smem constant byte address 0x4 - core index']
  #allocation1 [shape = 'u32[144,128]{1,0:T(1,128)}', space=vmem, size = 0x12000, scoped, tag = 'internal scratch']
  #allocation2 [shape = 'f32[256,32]{1,0:T(8,128)}', space=vmem, size = 0x20000, scoped, tag = 'scratch operand']
  %s0 = inlined_call_operand.vmem [shape: f32[2,1,512], index: 0, kind: input, shape index: {}]
  %s1 = inlined_call_operand.vmem [shape: f32[2,1,512], index: 1, kind: input, shape index: {}]
  %s2 = inlined_call_operand.vmem [shape: f32[2,2,512,32], index: 2, kind: input, shape index: {}]
  %s3 = inlined_call_operand.vmem [shape: f32[2,2,512,32], index: 3, kind: input, shape index: {}]
  %s4 = inlined_call_operand.vmem [shape: f32[2,2,512,32], index: 4, kind: input, shape index: {}]
  %s5 = inlined_call_operand.vmem [shape: f32[2,2,512,32], index: 5, kind: output, shape index: {}]
  %s6 = sld [smem:[#allocation0]]
  $region61: #{tpu_custom_call.1} parent=0
    _
  %s8 = ssub.s32 1, %s6
  %s9 = scalar_select 0, %s8, %s6
  loop: start=0, step=1, limit=18
  $region2: #{tpu_custom_call.1} parent=0 // loop_pre_header
    _
  $region3: #{tpu_custom_call.1} parent=0 // loop_header
    %s11 = sphi 0, %s15
    %p12 = scmp.ge.s32.totalorder %s11, 18
    %s18 = sphi 0, %s44
    %s19 = sphi 0, %s40
    %s20 = sphi 0, %s36
    %s21 = sphi 0, %s32
    %s22 = sphi 0, %s18
    %s23 = sphi 0, %s19
    %s24 = sphi 0, %s20
    %s25 = sphi 0, %s21
    %s26 = sphi 0, %s22
    %s27 = sphi 0, %s23
    %s28 = sphi 0, %s24
    %s29 = sphi 0, %s25
    %s49 = sphi 0, %s51
    %s52 = sphi 0, %s49
    %s53 = sphi 0, %s52
    %s69 = sphi 0, %s53
    %s77 = sphi 0, %s79
    %s80 = sphi 0, %s77
    %s81 = sphi 0, %s80
    %s97 = sphi 0, %s81
    %s107 = sphi 0, %s109
    %s110 = sphi 0, %s107
    %s111 = sphi 0, %s110
    %s127 = sphi 0, %s111
    %s137 = sphi 0, %s139
    %s140 = sphi 0, %s137
    %s141 = sphi 0, %s140
    %s157 = sphi 0, %s141
    %s167 = sphi 0, %s169
    %s170 = sphi 0, %s167
    %s171 = sphi 0, %s170
    %s187 = sphi 0, %s171
    %s197 = sphi 0, %s199
    %s200 = sphi 0, %s197
    %s201 = sphi 0, %s200
    %s217 = sphi 0, %s201
  $region4: #{tpu_custom_call.1} parent=0 // loop_header_branch
    %14 = sbr.rel (%p12) target = $region8
  $region5: #{tpu_custom_call.1} parent=0 // loop_body
    %s16 = ssub.s32 %s11, 1
    %s17 = ssub.s32 %s11, 2
    %s30 = sadd.s32 1, %s21
    %p31 = scmp.ge.s32.totalorder %s30, 2
    %s32 = scalar_select %p31, 0, %s30
    %s33 = sadd.s32 1, %s20
    %s34 = scalar_select %p31, %s33, %s20
    %p35 = scmp.ge.s32.totalorder %s34, 2
    %s36 = scalar_select %p35, 0, %s34
    %s37 = sadd.s32 1, %s19
    %s38 = scalar_select %p35, %s37, %s19
    %p39 = scmp.ge.s32.totalorder %s38, 2
    %s40 = scalar_select %p39, 0, %s38
    %s41 = sadd.s32 1, %s18
    %s42 = scalar_select %p39, %s41, %s18
    %p43 = scmp.ge.s32.totalorder %s42, 2
    %s44 = scalar_select %p43, 0, %s42
    %s45 = ssub.s32 %s18, %s44
    %s46 = ssub.s32 %s20, %s36
    %s47 = sor.u32 %s45, %s46
    %p48 = scmp.eq.s32.totalorder %s47, 0
    %s50 = sadd.s32 %s49, 1
    %s51 = scalar_select %p48, %s49, %s50
    %p54 = pneg %p48
    %p55 = scmp.eq.s32.totalorder %s11, 15
    %p56 = por %p54, %p55
    %p57 = scmp.ne.s32.totalorder %s49, %s52
    %p58 = scmp.eq.s32.totalorder %s11, 0
    %p59 = por %p57, %p58
    %p60 = scmp.ne.s32.totalorder %s49, %s52
    %p61 = scmp.eq.s32.totalorder %s16, 15
    %p62 = por %p60, %p61
    %p63 = scmp.ne.s32.totalorder %s52, %s53
    %p64 = scmp.eq.s32.totalorder %s16, 0
    %p65 = por %p63, %p64
    %p66 = scmp.ne.s32.totalorder %s52, %s53
    %p67 = scmp.eq.s32.totalorder %s17, 15
    %p68 = por %p66, %p67
    %p70 = scmp.ne.s32.totalorder %s53, %s69
    %p71 = scmp.eq.s32.totalorder %s17, 0
    %p72 = por %p70, %p71
    %s73 = ssub.s32 %s18, %s44
    %s74 = ssub.s32 %s21, %s32
    %s75 = sor.u32 %s73, %s74
    %p76 = scmp.eq.s32.totalorder %s75, 0
    %s78 = sadd.s32 %s77, 1
    %s79 = scalar_select %p76, %s77, %s78
    %p82 = pneg %p76
    %p83 = scmp.eq.s32.totalorder %s11, 15
    %p84 = por %p82, %p83
    %p85 = scmp.ne.s32.totalorder %s77, %s80
    %p86 = scmp.eq.s32.totalorder %s11, 0
    %p87 = por %p85, %p86
    %p88 = scmp.ne.s32.totalorder %s77, %s80
    %p89 = scmp.eq.s32.totalorder %s16, 15
    %p90 = por %p88, %p89
    %p91 = scmp.ne.s32.totalorder %s80, %s81
    %p92 = scmp.eq.s32.totalorder %s16, 0
    %p93 = por %p91, %p92
    %p94 = scmp.ne.s32.totalorder %s80, %s81
    %p95 = scmp.eq.s32.totalorder %s17, 15
    %p96 = por %p94, %p95
    %p98 = scmp.ne.s32.totalorder %s81, %s97
    %p99 = scmp.eq.s32.totalorder %s17, 0
    %p100 = por %p98, %p99
    %s101 = ssub.s32 %s18, %s44
    %s102 = ssub.s32 %s19, %s40
    %s103 = sor.u32 %s101, %s102
    %s104 = ssub.s32 %s20, %s36
    %s105 = sor.u32 %s103, %s104
    %p106 = scmp.eq.s32.totalorder %s105, 0
    %s108 = sadd.s32 %s107, 1
    %s109 = scalar_select %p106, %s107, %s108
    %p112 = pneg %p106
    %p113 = scmp.eq.s32.totalorder %s11, 15
    %p114 = por %p112, %p113
    %p115 = scmp.ne.s32.totalorder %s107, %s110
    %p116 = scmp.eq.s32.totalorder %s11, 0
    %p117 = por %p115, %p116
    %p118 = scmp.ne.s32.totalorder %s107, %s110
    %p119 = scmp.eq.s32.totalorder %s16, 15
    %p120 = por %p118, %p119
    %p121 = scmp.ne.s32.totalorder %s110, %s111
    %p122 = scmp.eq.s32.totalorder %s16, 0
    %p123 = por %p121, %p122
    %p124 = scmp.ne.s32.totalorder %s110, %s111
    %p125 = scmp.eq.s32.totalorder %s17, 15
    %p126 = por %p124, %p125
    %p128 = scmp.ne.s32.totalorder %s111, %s127
    %p129 = scmp.eq.s32.totalorder %s17, 0
    %p130 = por %p128, %p129
    %s131 = ssub.s32 %s18, %s44
    %s132 = ssub.s32 %s19, %s40
    %s133 = sor.u32 %s131, %s132
    %s134 = ssub.s32 %s21, %s32
    %s135 = sor.u32 %s133, %s134
    %p136 = scmp.eq.s32.totalorder %s135, 0
    %s138 = sadd.s32 %s137, 1
    %s139 = scalar_select %p136, %s137, %s138
    %p142 = pneg %p136
    %p143 = scmp.eq.s32.totalorder %s11, 15
    %p144 = por %p142, %p143
    %p145 = scmp.ne.s32.totalorder %s137, %s140
    %p146 = scmp.eq.s32.totalorder %s11, 0
    %p147 = por %p145, %p146
    %p148 = scmp.ne.s32.totalorder %s137, %s140
    %p149 = scmp.eq.s32.totalorder %s16, 15
    %p150 = por %p148, %p149
    %p151 = scmp.ne.s32.totalorder %s140, %s141
    %p152 = scmp.eq.s32.totalorder %s16, 0
    %p153 = por %p151, %p152
    %p154 = scmp.ne.s32.totalorder %s140, %s141
    %p155 = scmp.eq.s32.totalorder %s17, 15
    %p156 = por %p154, %p155
    %p158 = scmp.ne.s32.totalorder %s141, %s157
    %p159 = scmp.eq.s32.totalorder %s17, 0
    %p160 = por %p158, %p159
    %s161 = ssub.s32 %s18, %s44
    %s162 = ssub.s32 %s19, %s40
    %s163 = sor.u32 %s161, %s162
    %s164 = ssub.s32 %s21, %s32
    %s165 = sor.u32 %s163, %s164
    %p166 = scmp.eq.s32.totalorder %s165, 0
    %s168 = sadd.s32 %s167, 1
    %s169 = scalar_select %p166, %s167, %s168
    %p172 = pneg %p166
    %p173 = scmp.eq.s32.totalorder %s11, 15
    %p174 = por %p172, %p173
    %p175 = scmp.ne.s32.totalorder %s167, %s170
    %p176 = scmp.eq.s32.totalorder %s11, 0
    %p177 = por %p175, %p176
    %p178 = scmp.ne.s32.totalorder %s167, %s170
    %p179 = scmp.eq.s32.totalorder %s16, 15
    %p180 = por %p178, %p179
    %p181 = scmp.ne.s32.totalorder %s170, %s171
    %p182 = scmp.eq.s32.totalorder %s16, 0
    %p183 = por %p181, %p182
    %p184 = scmp.ne.s32.totalorder %s170, %s171
    %p185 = scmp.eq.s32.totalorder %s17, 15
    %p186 = por %p184, %p185
    %p188 = scmp.ne.s32.totalorder %s171, %s187
    %p189 = scmp.eq.s32.totalorder %s17, 0
    %p190 = por %p188, %p189
    %s191 = ssub.s32 %s18, %s44
    %s192 = ssub.s32 %s19, %s40
    %s193 = sor.u32 %s191, %s192
    %s194 = ssub.s32 %s20, %s36
    %s195 = sor.u32 %s193, %s194
    %p196 = scmp.eq.s32.totalorder %s195, 0
    %s198 = sadd.s32 %s197, 1
    %s199 = scalar_select %p196, %s197, %s198
    %p202 = pneg %p196
    %p203 = scmp.eq.s32.totalorder %s11, 15
    %p204 = por %p202, %p203
    %p205 = scmp.ne.s32.totalorder %s197, %s200
    %p206 = scmp.eq.s32.totalorder %s11, 0
    %p207 = por %p205, %p206
    %p208 = scmp.ne.s32.totalorder %s197, %s200
    %p209 = scmp.eq.s32.totalorder %s16, 15
    %p210 = por %p208, %p209
    %p211 = scmp.ne.s32.totalorder %s200, %s201
    %p212 = scmp.eq.s32.totalorder %s16, 0
    %p213 = por %p211, %p212
    %p214 = scmp.ne.s32.totalorder %s200, %s201
    %p215 = scmp.eq.s32.totalorder %s17, 15
    %p216 = por %p214, %p215
    %p218 = scmp.ne.s32.totalorder %s201, %s217
    %p219 = scmp.eq.s32.totalorder %s17, 0
    %p220 = por %p218, %p219
    %p221 = scmp.le.s32.totalorder 1, %s11
    %p222 = scmp.lt.s32.totalorder %s11, 17
    %p223 = pnand %p221, %p222
    %p224 = pneg %p223
    // Predicated region
    $region9: #{tpu_custom_call.1} parent=5 // pred_check
      _
    $region10: #{tpu_custom_call.1} parent=5 // pred_check_branch
      %226 = sbr.rel (%p223) target = $region12
    $region11: #{tpu_custom_call.1} parent=5 // pred_region
      %s227 = ssub.s32 %s11, 1
    $region12: #{tpu_custom_call.1} parent=5 // pred_fallthru
      _
    %p228 = scmp.lt.s32.totalorder %s11, 16
    // Predicated region
    $region13: #{tpu_custom_call.1} parent=5 // pred_check
      %p229 = pneg %p228
    $region14: #{tpu_custom_call.1} parent=5 // pred_check_branch
      %231 = sbr.rel (%p229) target = $region16
    $region15: #{tpu_custom_call.1} parent=5 // pred_region
      // Predicated region
      $region17: #{tpu_custom_call.1} parent=15 // pred_check
        %p232 = pneg %p59
      $region18: #{tpu_custom_call.1} parent=15 // pred_check_branch
        %234 = sbr.rel (%p232) target = $region20
      $region19: #{tpu_custom_call.1} parent=15 // pred_region
        %s235 = smul.u32 2, %s20
        %p236 = scmp.lt.s32.totalorder %s18, 1
        %s237 = scalar_select %p236, %s18, 1
        %p238 = scmp.lt.s32.totalorder %s235, 3
        %s239 = scalar_select %p238, %s235, 3
        %s240 = smul.addr %s237, 4
        %s241 = sadd.s32 %s239, %s240
        %s242 = scalar_lea.vmem %s0, %s241
        %s243 = smul.u32 2, %s20
      $region20: #{tpu_custom_call.1} parent=15 // pred_fallthru
        _
      // Predicated region
      $region21: #{tpu_custom_call.1} parent=15 // pred_check
        %p244 = pneg %p87
      $region22: #{tpu_custom_call.1} parent=15 // pred_check_branch
        %246 = sbr.rel (%p244) target = $region24
      $region23: #{tpu_custom_call.1} parent=15 // pred_region
        %s247 = smul.u32 2, %s21
        %p248 = scmp.lt.s32.totalorder %s18, 1
        %s249 = scalar_select %p248, %s18, 1
        %p250 = scmp.lt.s32.totalorder %s247, 3
        %s251 = scalar_select %p250, %s247, 3
        %s252 = smul.addr %s249, 4
        %s253 = sadd.s32 %s251, %s252
        %s254 = scalar_lea.vmem %s1, %s253
        %s255 = smul.u32 2, %s21
      $region24: #{tpu_custom_call.1} parent=15 // pred_fallthru
        _
      // Predicated region
      $region25: #{tpu_custom_call.1} parent=15 // pred_check
        %p256 = pneg %p117
      $region26: #{tpu_custom_call.1} parent=15 // pred_check_branch
        %258 = sbr.rel (%p256) target = $region28
      $region27: #{tpu_custom_call.1} parent=15 // pred_region
        %s259 = smul.u32 32, %s20
        %p260 = scmp.lt.s32.totalorder %s18, 1
        %s261 = scalar_select %p260, %s18, 1
        %p262 = scmp.lt.s32.totalorder %s19, 1
        %s263 = scalar_select %p262, %s19, 1
        %p264 = scmp.lt.s32.totalorder %s259, 63
        %s265 = scalar_select %p264, %s259, 63
        %s266 = smul.addr %s263, 64
        %s267 = sadd.s32 %s265, %s266
        %s268 = smul.addr %s261, 128
        %s269 = sadd.s32 %s267, %s268
        %s270 = smul.addr %s269, 8
        %s271 = scalar_lea.vmem %s2, %s270
        %s272 = smul.u32 32, %s20
      $region28: #{tpu_custom_call.1} parent=15 // pred_fallthru
        _
      // Predicated region
      $region29: #{tpu_custom_call.1} parent=15 // pred_check
        %p273 = pneg %p147
      $region30: #{tpu_custom_call.1} parent=15 // pred_check_branch
        %275 = sbr.rel (%p273) target = $region32
      $region31: #{tpu_custom_call.1} parent=15 // pred_region
        %s276 = smul.u32 32, %s21
        %p277 = scmp.lt.s32.totalorder %s18, 1
        %s278 = scalar_select %p277, %s18, 1
        %p279 = scmp.lt.s32.totalorder %s19, 1
        %s280 = scalar_select %p279, %s19, 1
        %p281 = scmp.lt.s32.totalorder %s276, 63
        %s282 = scalar_select %p281, %s276, 63
        %s283 = smul.addr %s280, 64
        %s284 = sadd.s32 %s282, %s283
        %s285 = smul.addr %s278, 128
        %s286 = sadd.s32 %s284, %s285
        %s287 = smul.addr %s286, 8
        %s288 = scalar_lea.vmem %s3, %s287
        %s289 = smul.u32 32, %s21
      $region32: #{tpu_custom_call.1} parent=15 // pred_fallthru
        _
      // Predicated region
      $region33: #{tpu_custom_call.1} parent=15 // pred_check
        %p290 = pneg %p177
      $region34: #{tpu_custom_call.1} parent=15 // pred_check_branch
        %292 = sbr.rel (%p290) target = $region36
      $region35: #{tpu_custom_call.1} parent=15 // pred_region
        %s293 = smul.u32 32, %s21
        %p294 = scmp.lt.s32.totalorder %s18, 1
        %s295 = scalar_select %p294, %s18, 1
        %p296 = scmp.lt.s32.totalorder %s19, 1
        %s297 = scalar_select %p296, %s19, 1
        %p298 = scmp.lt.s32.totalorder %s293, 63
        %s299 = scalar_select %p298, %s293, 63
        %s300 = smul.addr %s297, 64
        %s301 = sadd.s32 %s299, %s300
        %s302 = smul.addr %s295, 128
        %s303 = sadd.s32 %s301, %s302
        %s304 = smul.addr %s303, 8
        %s305 = scalar_lea.vmem %s4, %s304
        %s306 = smul.u32 32, %s21
      $region36: #{tpu_custom_call.1} parent=15 // pred_fallthru
        _
    $region16: #{tpu_custom_call.1} parent=5 // pred_fallthru
      _
    %p307 = scmp.le.s32.totalorder 1, %s11
    %p308 = scmp.lt.s32.totalorder %s11, 17
    %p309 = pnand %p307, %p308
    %p310 = pneg %p309
    // Predicated region
    $region37: #{tpu_custom_call.1} parent=5 // pred_check
      _
    $region38: #{tpu_custom_call.1} parent=5 // pred_check_branch
      %312 = sbr.rel (%p309) target = $region40
    $region39: #{tpu_custom_call.1} parent=5 // pred_region
      %s313 = ssub.s32 %s11, 1
      %s314 = smul.u32 2, %s24
      %p315 = scmp.lt.s32.totalorder %s22, 1
      %s316 = scalar_select %p315, %s22, 1
      %p317 = scmp.lt.s32.totalorder %s314, 3
      %s318 = scalar_select %p317, %s314, 3
      %s319 = smul.addr %s316, 4
      %s320 = sadd.s32 %s318, %s319
      %s321 = scalar_lea.vmem %s0, %s320
      %p322 = pneg %p65
      %p323 = pneg %p62
      %s324 = smul.u32 2, %s25
      %p325 = scmp.lt.s32.totalorder %s22, 1
      %s326 = scalar_select %p325, %s22, 1
      %p327 = scmp.lt.s32.totalorder %s324, 3
      %s328 = scalar_select %p327, %s324, 3
      %s329 = smul.addr %s326, 4
      %s330 = sadd.s32 %s328, %s329
      %s331 = scalar_lea.vmem %s1, %s330
      %p332 = pneg %p93
      %p333 = pneg %p90
      %s334 = smul.u32 32, %s24
      %p335 = scmp.lt.s32.totalorder %s22, 1
      %s336 = scalar_select %p335, %s22, 1
      %p337 = scmp.lt.s32.totalorder %s23, 1
      %s338 = scalar_select %p337, %s23, 1
      %p339 = scmp.lt.s32.totalorder %s334, 63
      %s340 = scalar_select %p339, %s334, 63
      %s341 = smul.addr %s338, 64
      %s342 = sadd.s32 %s340, %s341
      %s343 = smul.addr %s336, 128
      %s344 = sadd.s32 %s342, %s343
      %s345 = smul.addr %s344, 8
      %s346 = scalar_lea.vmem %s2, %s345
      %p347 = pneg %p123
      %p348 = pneg %p120
      %s349 = smul.u32 32, %s25
      %p350 = scmp.lt.s32.totalorder %s22, 1
      %s351 = scalar_select %p350, %s22, 1
      %p352 = scmp.lt.s32.totalorder %s23, 1
      %s353 = scalar_select %p352, %s23, 1
      %p354 = scmp.lt.s32.totalorder %s349, 63
      %s355 = scalar_select %p354, %s349, 63
      %s356 = smul.addr %s353, 64
      %s357 = sadd.s32 %s355, %s356
      %s358 = smul.addr %s351, 128
      %s359 = sadd.s32 %s357, %s358
      %s360 = smul.addr %s359, 8
      %s361 = scalar_lea.vmem %s3, %s360
      %p362 = pneg %p153
      %p363 = pneg %p150
      %s364 = smul.u32 32, %s25
      %p365 = scmp.lt.s32.totalorder %s22, 1
      %s366 = scalar_select %p365, %s22, 1
      %p367 = scmp.lt.s32.totalorder %s23, 1
      %s368 = scalar_select %p367, %s23, 1
      %p369 = scmp.lt.s32.totalorder %s364, 63
      %s370 = scalar_select %p369, %s364, 63
      %s371 = smul.addr %s368, 64
      %s372 = sadd.s32 %s370, %s371
      %s373 = smul.addr %s366, 128
      %s374 = sadd.s32 %s372, %s373
      %s375 = smul.addr %s374, 8
      %s376 = scalar_lea.vmem %s4, %s375
      %p377 = pneg %p183
      %p378 = pneg %p180
      %p379 = pneg %p213
      %p380 = pneg %p210
      %s381 = smul.u32 32, %s24
      %p382 = scmp.lt.s32.totalorder %s22, 1
      %s383 = scalar_select %p382, %s22, 1
      %p384 = scmp.lt.s32.totalorder %s23, 1
      %s385 = scalar_select %p384, %s23, 1
      %p386 = scmp.lt.s32.totalorder %s381, 63
      %s387 = scalar_select %p386, %s381, 63
      %s388 = smul.addr %s385, 64
      %s389 = sadd.s32 %s387, %s388
      %s390 = smul.addr %s383, 128
      %s391 = sadd.s32 %s389, %s390
      %s392 = smul.addr %s391, 8
      %s393 = scalar_lea.vmem %s5, %s392
      %s394 = smul.u32 2, %s24
      %p395 = scmp.lt.s32.totalorder %s22, 1
      %s396 = scalar_select %p395, %s22, 1
      %p397 = scmp.lt.s32.totalorder %s394, 3
      %s398 = scalar_select %p397, %s394, 3
      %s399 = smul.addr %s396, 4
      %s400 = sadd.s32 %s398, %s399
      %s401 = scalar_lea.vmem %s0, %s400
      %s402 = smul.u32 2, %s24
      %s403 = smul.u32 2, %s25
      %p404 = scmp.lt.s32.totalorder %s22, 1
      %s405 = scalar_select %p404, %s22, 1
      %p406 = scmp.lt.s32.totalorder %s403, 3
      %s407 = scalar_select %p406, %s403, 3
      %s408 = smul.addr %s405, 4
      %s409 = sadd.s32 %s407, %s408
      %s410 = scalar_lea.vmem %s1, %s409
      %s411 = smul.u32 2, %s25
      %s412 = smul.u32 32, %s24
      %p413 = scmp.lt.s32.totalorder %s22, 1
      %s414 = scalar_select %p413, %s22, 1
      %p415 = scmp.lt.s32.totalorder %s23, 1
      %s416 = scalar_select %p415, %s23, 1
      %p417 = scmp.lt.s32.totalorder %s412, 63
      %s418 = scalar_select %p417, %s412, 63
      %s419 = smul.addr %s416, 64
      %s420 = sadd.s32 %s418, %s419
      %s421 = smul.addr %s414, 128
      %s422 = sadd.s32 %s420, %s421
      %s423 = smul.addr %s422, 8
      %s424 = scalar_lea.vmem %s2, %s423
      %s425 = smul.u32 32, %s24
      %s426 = smul.u32 32, %s25
      %p427 = scmp.lt.s32.totalorder %s22, 1
      %s428 = scalar_select %p427, %s22, 1
      %p429 = scmp.lt.s32.totalorder %s23, 1
      %s430 = scalar_select %p429, %s23, 1
      %p431 = scmp.lt.s32.totalorder %s426, 63
      %s432 = scalar_select %p431, %s426, 63
      %s433 = smul.addr %s430, 64
      %s434 = sadd.s32 %s432, %s433
      %s435 = smul.addr %s428, 128
      %s436 = sadd.s32 %s434, %s435
      %s437 = smul.addr %s436, 8
      %s438 = scalar_lea.vmem %s3, %s437
      %s439 = smul.u32 32, %s25
      %s440 = smul.u32 32, %s25
      %p441 = scmp.lt.s32.totalorder %s22, 1
      %s442 = scalar_select %p441, %s22, 1
      %p443 = scmp.lt.s32.totalorder %s23, 1
      %s444 = scalar_select %p443, %s23, 1
      %p445 = scmp.lt.s32.totalorder %s440, 63
      %s446 = scalar_select %p445, %s440, 63
      %s447 = smul.addr %s444, 64
      %s448 = sadd.s32 %s446, %s447
      %s449 = smul.addr %s442, 128
      %s450 = sadd.s32 %s448, %s449
      %s451 = smul.addr %s450, 8
      %s452 = scalar_lea.vmem %s4, %s451
      %s453 = smul.u32 32, %s25
      %s454 = smul.u32 32, %s24
      %p455 = scmp.lt.s32.totalorder %s22, 1
      %s456 = scalar_select %p455, %s22, 1
      %p457 = scmp.lt.s32.totalorder %s23, 1
      %s458 = scalar_select %p457, %s23, 1
      %p459 = scmp.lt.s32.totalorder %s454, 63
      %s460 = scalar_select %p459, %s454, 63
      %s461 = smul.addr %s458, 64
      %s462 = sadd.s32 %s460, %s461
      %s463 = smul.addr %s456, 128
      %s464 = sadd.s32 %s462, %s463
      %s465 = smul.addr %s464, 8
      %s466 = scalar_lea.vmem %s5, %s465
      %s467 = smul.u32 32, %s24
      %p469 = scmp.eq.s32.totalorder %s25, 0
      // Predicated region
      $region41: #{tpu_custom_call.1} parent=39 // pred_check
        %p470 = pneg %p469
      $region42: #{tpu_custom_call.1} parent=39 // pred_check_branch
        %472 = sbr.rel (%p470) target = $region44
      $region43: #{tpu_custom_call.1} parent=39 // pred_region
        %vm473 = vcmask 261120
        %474 = vst.msk [vmem:[#allocation2] sm:$0xff] %vm473, 0.0
        %475 = vst.msk [vmem:[#allocation2 + $0x8] sm:$0xff] %vm473, 0.0
        %476 = vst.msk [vmem:[#allocation2 + $0x10] sm:$0xff] %vm473, 0.0
        %477 = vst.msk [vmem:[#allocation2 + $0x18] sm:$0xff] %vm473, 0.0
        %478 = vst.msk [vmem:[#allocation2 + $0x20] sm:$0xff] %vm473, 0.0
        %479 = vst.msk [vmem:[#allocation2 + $0x28] sm:$0xff] %vm473, 0.0
        %480 = vst.msk [vmem:[#allocation2 + $0x30] sm:$0xff] %vm473, 0.0
        %481 = vst.msk [vmem:[#allocation2 + $0x38] sm:$0xff] %vm473, 0.0
        %482 = vst.msk [vmem:[#allocation2 + $0x40] sm:$0xff] %vm473, 0.0
        %483 = vst.msk [vmem:[#allocation2 + $0x48] sm:$0xff] %vm473, 0.0
        %484 = vst.msk [vmem:[#allocation2 + $0x50] sm:$0xff] %vm473, 0.0
        %485 = vst.msk [vmem:[#allocation2 + $0x58] sm:$0xff] %vm473, 0.0
        %486 = vst.msk [vmem:[#allocation2 + $0x60] sm:$0xff] %vm473, 0.0
        %487 = vst.msk [vmem:[#allocation2 + $0x68] sm:$0xff] %vm473, 0.0
        %488 = vst.msk [vmem:[#allocation2 + $0x70] sm:$0xff] %vm473, 0.0
        %489 = vst.msk [vmem:[#allocation2 + $0x78] sm:$0xff] %vm473, 0.0
        %490 = vst.msk [vmem:[#allocation2 + $0x80] sm:$0xff] %vm473, 0.0
        %491 = vst.msk [vmem:[#allocation2 + $0x88] sm:$0xff] %vm473, 0.0
        %492 = vst.msk [vmem:[#allocation2 + $0x90] sm:$0xff] %vm473, 0.0
        %493 = vst.msk [vmem:[#allocation2 + $0x98] sm:$0xff] %vm473, 0.0
        %494 = vst.msk [vmem:[#allocation2 + $0xa0] sm:$0xff] %vm473, 0.0
        %495 = vst.msk [vmem:[#allocation2 + $0xa8] sm:$0xff] %vm473, 0.0
        %496 = vst.msk [vmem:[#allocation2 + $0xb0] sm:$0xff] %vm473, 0.0
        %497 = vst.msk [vmem:[#allocation2 + $0xb8] sm:$0xff] %vm473, 0.0
        %498 = vst.msk [vmem:[#allocation2 + $0xc0] sm:$0xff] %vm473, 0.0
        %499 = vst.msk [vmem:[#allocation2 + $0xc8] sm:$0xff] %vm473, 0.0
        %500 = vst.msk [vmem:[#allocation2 + $0xd0] sm:$0xff] %vm473, 0.0
        %501 = vst.msk [vmem:[#allocation2 + $0xd8] sm:$0xff] %vm473, 0.0
        %502 = vst.msk [vmem:[#allocation2 + $0xe0] sm:$0xff] %vm473, 0.0
        %503 = vst.msk [vmem:[#allocation2 + $0xe8] sm:$0xff] %vm473, 0.0
        %504 = vst.msk [vmem:[#allocation2 + $0xf0] sm:$0xff] %vm473, 0.0
        %505 = vst.msk [vmem:[#allocation2 + $0xf8] sm:$0xff] %vm473, 0.0
      $region44: #{tpu_custom_call.1} parent=39 // pred_fallthru
        _
      %v506 = vld [vmem:[%s424] sm:$0xff]
      %v507 = vld [vmem:[%s424 + $0x8] sm:$0xff]
      %v508 = vld [vmem:[%s424 + $0x10] sm:$0xff]
      %v509 = vld [vmem:[%s424 + $0x18] sm:$0xff]
      %v510 = vld [vmem:[%s424 + $0x20] sm:$0xff]
      %v511 = vld [vmem:[%s424 + $0x28] sm:$0xff]
      %v512 = vld [vmem:[%s424 + $0x30] sm:$0xff]
      %v513 = vld [vmem:[%s424 + $0x38] sm:$0xff]
      %v514 = vld [vmem:[%s424 + $0x40] sm:$0xff]
      %v515 = vld [vmem:[%s424 + $0x48] sm:$0xff]
      %v516 = vld [vmem:[%s424 + $0x50] sm:$0xff]
      %v517 = vld [vmem:[%s424 + $0x58] sm:$0xff]
      %v518 = vld [vmem:[%s424 + $0x60] sm:$0xff]
      %v519 = vld [vmem:[%s424 + $0x68] sm:$0xff]
      %v520 = vld [vmem:[%s424 + $0x70] sm:$0xff]
      %v521 = vld [vmem:[%s424 + $0x78] sm:$0xff]
      %v522 = vld [vmem:[%s424 + $0x80] sm:$0xff]
      %v523 = vld [vmem:[%s424 + $0x88] sm:$0xff]
      %v524 = vld [vmem:[%s424 + $0x90] sm:$0xff]
      %v525 = vld [vmem:[%s424 + $0x98] sm:$0xff]
      %v526 = vld [vmem:[%s424 + $0xa0] sm:$0xff]
      %v527 = vld [vmem:[%s424 + $0xa8] sm:$0xff]
      %v528 = vld [vmem:[%s424 + $0xb0] sm:$0xff]
      %v529 = vld [vmem:[%s424 + $0xb8] sm:$0xff]
      %v530 = vld [vmem:[%s424 + $0xc0] sm:$0xff]
      %v531 = vld [vmem:[%s424 + $0xc8] sm:$0xff]
      %v532 = vld [vmem:[%s424 + $0xd0] sm:$0xff]
      %v533 = vld [vmem:[%s424 + $0xd8] sm:$0xff]
      %v534 = vld [vmem:[%s424 + $0xe0] sm:$0xff]
      %v535 = vld [vmem:[%s424 + $0xe8] sm:$0xff]
      %v536 = vld [vmem:[%s424 + $0xf0] sm:$0xff]
      %v537 = vld [vmem:[%s424 + $0xf8] sm:$0xff]
      %v538 = vld [vmem:[%s438] sm:$0xff]
      %v539 = vld [vmem:[%s438 + $0x8] sm:$0xff]
      %v540 = vld [vmem:[%s438 + $0x10] sm:$0xff]
      %v541 = vld [vmem:[%s438 + $0x18] sm:$0xff]
      %v542 = vld [vmem:[%s438 + $0x20] sm:$0xff]
      %v543 = vld [vmem:[%s438 + $0x28] sm:$0xff]
      %v544 = vld [vmem:[%s438 + $0x30] sm:$0xff]
      %v545 = vld [vmem:[%s438 + $0x38] sm:$0xff]
      %v546 = vld [vmem:[%s438 + $0x40] sm:$0xff]
      %v547 = vld [vmem:[%s438 + $0x48] sm:$0xff]
      %v548 = vld [vmem:[%s438 + $0x50] sm:$0xff]
      %v549 = vld [vmem:[%s438 + $0x58] sm:$0xff]
      %v550 = vld [vmem:[%s438 + $0x60] sm:$0xff]
      %v551 = vld [vmem:[%s438 + $0x68] sm:$0xff]
      %v552 = vld [vmem:[%s438 + $0x70] sm:$0xff]
      %v553 = vld [vmem:[%s438 + $0x78] sm:$0xff]
      %v554 = vld [vmem:[%s438 + $0x80] sm:$0xff]
      %v555 = vld [vmem:[%s438 + $0x88] sm:$0xff]
      %v556 = vld [vmem:[%s438 + $0x90] sm:$0xff]
      %v557 = vld [vmem:[%s438 + $0x98] sm:$0xff]
      %v558 = vld [vmem:[%s438 + $0xa0] sm:$0xff]
      %v559 = vld [vmem:[%s438 + $0xa8] sm:$0xff]
      %v560 = vld [vmem:[%s438 + $0xb0] sm:$0xff]
      %v561 = vld [vmem:[%s438 + $0xb8] sm:$0xff]
      %v562 = vld [vmem:[%s438 + $0xc0] sm:$0xff]
      %v563 = vld [vmem:[%s438 + $0xc8] sm:$0xff]
      %v564 = vld [vmem:[%s438 + $0xd0] sm:$0xff]
      %v565 = vld [vmem:[%s438 + $0xd8] sm:$0xff]
      %v566 = vld [vmem:[%s438 + $0xe0] sm:$0xff]
      %v567 = vld [vmem:[%s438 + $0xe8] sm:$0xff]
      %v568 = vld [vmem:[%s438 + $0xf0] sm:$0xff]
      %v569 = vld [vmem:[%s438 + $0xf8] sm:$0xff]
      %v570 = vld [vmem:[%s452] sm:$0xff]
      %v571 = vld [vmem:[%s452 + $0x8] sm:$0xff]
      %v572 = vld [vmem:[%s452 + $0x10] sm:$0xff]
      %v573 = vld [vmem:[%s452 + $0x18] sm:$0xff]
      %v574 = vld [vmem:[%s452 + $0x20] sm:$0xff]
      %v575 = vld [vmem:[%s452 + $0x28] sm:$0xff]
      %v576 = vld [vmem:[%s452 + $0x30] sm:$0xff]
      %v577 = vld [vmem:[%s452 + $0x38] sm:$0xff]
      %v578 = vld [vmem:[%s452 + $0x40] sm:$0xff]
      %v579 = vld [vmem:[%s452 + $0x48] sm:$0xff]
      %v580 = vld [vmem:[%s452 + $0x50] sm:$0xff]
      %v581 = vld [vmem:[%s452 + $0x58] sm:$0xff]
      %v582 = vld [vmem:[%s452 + $0x60] sm:$0xff]
      %v583 = vld [vmem:[%s452 + $0x68] sm:$0xff]
      %v584 = vld [vmem:[%s452 + $0x70] sm:$0xff]
      %v585 = vld [vmem:[%s452 + $0x78] sm:$0xff]
      %v586 = vld [vmem:[%s452 + $0x80] sm:$0xff]
      %v587 = vld [vmem:[%s452 + $0x88] sm:$0xff]
      %v588 = vld [vmem:[%s452 + $0x90] sm:$0xff]
      %v589 = vld [vmem:[%s452 + $0x98] sm:$0xff]
      %v590 = vld [vmem:[%s452 + $0xa0] sm:$0xff]
      %v591 = vld [vmem:[%s452 + $0xa8] sm:$0xff]
      %v592 = vld [vmem:[%s452 + $0xb0] sm:$0xff]
      %v593 = vld [vmem:[%s452 + $0xb8] sm:$0xff]
      %v594 = vld [vmem:[%s452 + $0xc0] sm:$0xff]
      %v595 = vld [vmem:[%s452 + $0xc8] sm:$0xff]
      %v596 = vld [vmem:[%s452 + $0xd0] sm:$0xff]
      %v597 = vld [vmem:[%s452 + $0xd8] sm:$0xff]
      %v598 = vld [vmem:[%s452 + $0xe0] sm:$0xff]
      %v599 = vld [vmem:[%s452 + $0xe8] sm:$0xff]
      %v600 = vld [vmem:[%s452 + $0xf0] sm:$0xff]
      %v601 = vld [vmem:[%s452 + $0xf8] sm:$0xff]
      %v602 = vld [vmem:[%s401] sm:$0x3]
      %v603 = vld [vmem:[%s410] sm:$0x3]
      %v605 = vlaneseq
      %v606 = vshrl.u32 %v605, 7
      %v607 = vsub.s32 0, %v606
      %v608 = vrot.slane %v602, %v607
      %v609 = vlaneseq
      %v610 = vshrl.u32 %v609, 7
      %v611 = vsub.s32 1, %v610
      %v612 = vrot.slane %v602, %v611
      %v615 = vlaneseq
      %v616 = vshrl.u32 %v615, 7
      %v617 = vsub.s32 0, %v616
      %v618 = vrot.slane %v608, %v617
      %620 = vbcast.lane.b32.xlu0 %v618, 256
      %v621 = vpop.permute.xlu0 %620
      %s623 = sor.u32 256, 8
      %624 = vbcast.lane.b32.xlu0 %v618, %s623
      %v625 = vpop.permute.xlu0 %624
      %s627 = sor.u32 256, 16
      %628 = vbcast.lane.b32.xlu0 %v618, %s627
      %v629 = vpop.permute.xlu0 %628
      %s631 = sor.u32 256, 24
      %632 = vbcast.lane.b32.xlu0 %v618, %s631
      %v633 = vpop.permute.xlu0 %632
      %s635 = sor.u32 256, 32
      %636 = vbcast.lane.b32.xlu0 %v618, %s635
      %v637 = vpop.permute.xlu0 %636
      %s639 = sor.u32 256, 40
      %640 = vbcast.lane.b32.xlu0 %v618, %s639
      %v641 = vpop.permute.xlu0 %640
      %s643 = sor.u32 256, 48
      %644 = vbcast.lane.b32.xlu0 %v618, %s643
      %v645 = vpop.permute.xlu0 %644
      %s647 = sor.u32 256, 56
      %648 = vbcast.lane.b32.xlu0 %v618, %s647
      %v649 = vpop.permute.xlu0 %648
      %s651 = sor.u32 256, 64
      %652 = vbcast.lane.b32.xlu0 %v618, %s651
      %v653 = vpop.permute.xlu0 %652
      %s655 = sor.u32 256, 72
      %656 = vbcast.lane.b32.xlu0 %v618, %s655
      %v657 = vpop.permute.xlu0 %656
      %s659 = sor.u32 256, 80
      %660 = vbcast.lane.b32.xlu0 %v618, %s659
      %v661 = vpop.permute.xlu0 %660
      %s663 = sor.u32 256, 88
      %664 = vbcast.lane.b32.xlu0 %v618, %s663
      %v665 = vpop.permute.xlu0 %664
      %s667 = sor.u32 256, 96
      %668 = vbcast.lane.b32.xlu0 %v618, %s667
      %v669 = vpop.permute.xlu0 %668
      %s671 = sor.u32 256, 104
      %672 = vbcast.lane.b32.xlu0 %v618, %s671
      %v673 = vpop.permute.xlu0 %672
      %s675 = sor.u32 256, 112
      %676 = vbcast.lane.b32.xlu0 %v618, %s675
      %v677 = vpop.permute.xlu0 %676
      %s679 = sor.u32 256, 120
      %680 = vbcast.lane.b32.xlu0 %v618, %s679
      %v681 = vpop.permute.xlu0 %680
      %v682 = vlaneseq
      %v683 = vshrl.u32 %v682, 7
      %v684 = vsub.s32 0, %v683
      %v685 = vrot.slane %v612, %v684
      %687 = vbcast.lane.b32.xlu0 %v685, 256
      %v688 = vpop.permute.xlu0 %687
      %s690 = sor.u32 256, 8
      %691 = vbcast.lane.b32.xlu0 %v685, %s690
      %v692 = vpop.permute.xlu0 %691
      %s694 = sor.u32 256, 16
      %695 = vbcast.lane.b32.xlu0 %v685, %s694
      %v696 = vpop.permute.xlu0 %695
      %s698 = sor.u32 256, 24
      %699 = vbcast.lane.b32.xlu0 %v685, %s698
      %v700 = vpop.permute.xlu0 %699
      %s702 = sor.u32 256, 32
      %703 = vbcast.lane.b32.xlu0 %v685, %s702
      %v704 = vpop.permute.xlu0 %703
      %s706 = sor.u32 256, 40
      %707 = vbcast.lane.b32.xlu0 %v685, %s706
      %v708 = vpop.permute.xlu0 %707
      %s710 = sor.u32 256, 48
      %711 = vbcast.lane.b32.xlu0 %v685, %s710
      %v712 = vpop.permute.xlu0 %711
      %s714 = sor.u32 256, 56
      %715 = vbcast.lane.b32.xlu0 %v685, %s714
      %v716 = vpop.permute.xlu0 %715
      %s718 = sor.u32 256, 64
      %719 = vbcast.lane.b32.xlu0 %v685, %s718
      %v720 = vpop.permute.xlu0 %719
      %s722 = sor.u32 256, 72
      %723 = vbcast.lane.b32.xlu0 %v685, %s722
      %v724 = vpop.permute.xlu0 %723
      %s726 = sor.u32 256, 80
      %727 = vbcast.lane.b32.xlu0 %v685, %s726
      %v728 = vpop.permute.xlu0 %727
      %s730 = sor.u32 256, 88
      %731 = vbcast.lane.b32.xlu0 %v685, %s730
      %v732 = vpop.permute.xlu0 %731
      %s734 = sor.u32 256, 96
      %735 = vbcast.lane.b32.xlu0 %v685, %s734
      %v736 = vpop.permute.xlu0 %735
      %s738 = sor.u32 256, 104
      %739 = vbcast.lane.b32.xlu0 %v685, %s738
      %v740 = vpop.permute.xlu0 %739
      %s742 = sor.u32 256, 112
      %743 = vbcast.lane.b32.xlu0 %v685, %s742
      %v744 = vpop.permute.xlu0 %743
      %s746 = sor.u32 256, 120
      %747 = vbcast.lane.b32.xlu0 %v685, %s746
      %v748 = vpop.permute.xlu0 %747
      %v749 = vmul.f32 %v621, 0.4204482
      %v750 = vmul.f32 %v625, 0.4204482
      %v751 = vmul.f32 %v629, 0.4204482
      %v752 = vmul.f32 %v633, 0.4204482
      %v753 = vmul.f32 %v637, 0.4204482
      %v754 = vmul.f32 %v641, 0.4204482
      %v755 = vmul.f32 %v645, 0.4204482
      %v756 = vmul.f32 %v649, 0.4204482
      %v757 = vmul.f32 %v653, 0.4204482
      %v758 = vmul.f32 %v657, 0.4204482
      %v759 = vmul.f32 %v661, 0.4204482
      %v760 = vmul.f32 %v665, 0.4204482
      %v761 = vmul.f32 %v669, 0.4204482
      %v762 = vmul.f32 %v673, 0.4204482
      %v763 = vmul.f32 %v677, 0.4204482
      %v764 = vmul.f32 %v681, 0.4204482
      %v765 = vmul.f32 %v688, 0.4204482
      %v766 = vmul.f32 %v692, 0.4204482
      %v767 = vmul.f32 %v696, 0.4204482
      %v768 = vmul.f32 %v700, 0.4204482
      %v769 = vmul.f32 %v704, 0.4204482
      %v770 = vmul.f32 %v708, 0.4204482
      %v771 = vmul.f32 %v712, 0.4204482
      %v772 = vmul.f32 %v716, 0.4204482
      %v773 = vmul.f32 %v720, 0.4204482
      %v774 = vmul.f32 %v724, 0.4204482
      %v775 = vmul.f32 %v728, 0.4204482
      %v776 = vmul.f32 %v732, 0.4204482
      %v777 = vmul.f32 %v736, 0.4204482
      %v778 = vmul.f32 %v740, 0.4204482
      %v779 = vmul.f32 %v744, 0.4204482
      %v780 = vmul.f32 %v748, 0.4204482
      %v781 = vmul.f32 %v506, %v749
      %v782 = vmul.f32 %v507, %v750
      %v783 = vmul.f32 %v508, %v751
      %v784 = vmul.f32 %v509, %v752
      %v785 = vmul.f32 %v510, %v753
      %v786 = vmul.f32 %v511, %v754
      %v787 = vmul.f32 %v512, %v755
      %v788 = vmul.f32 %v513, %v756
      %v789 = vmul.f32 %v514, %v757
      %v790 = vmul.f32 %v515, %v758
      %v791 = vmul.f32 %v516, %v759
      %v792 = vmul.f32 %v517, %v760
      %v793 = vmul.f32 %v518, %v761
      %v794 = vmul.f32 %v519, %v762
      %v795 = vmul.f32 %v520, %v763
      %v796 = vmul.f32 %v521, %v764
      %v797 = vmul.f32 %v522, %v765
      %v798 = vmul.f32 %v523, %v766
      %v799 = vmul.f32 %v524, %v767
      %v800 = vmul.f32 %v525, %v768
      %v801 = vmul.f32 %v526, %v769
      %v802 = vmul.f32 %v527, %v770
      %v803 = vmul.f32 %v528, %v771
      %v804 = vmul.f32 %v529, %v772
      %v805 = vmul.f32 %v530, %v773
      %v806 = vmul.f32 %v531, %v774
      %v807 = vmul.f32 %v532, %v775
      %v808 = vmul.f32 %v533, %v776
      %v809 = vmul.f32 %v534, %v777
      %v810 = vmul.f32 %v535, %v778
      %v811 = vmul.f32 %v536, %v779
      %v812 = vmul.f32 %v537, %v780
      %v814 = vlaneseq
      %v815 = vshrl.u32 %v814, 7
      %v816 = vsub.s32 0, %v815
      %v817 = vrot.slane %v603, %v816
      %v818 = vlaneseq
      %v819 = vshrl.u32 %v818, 7
      %v820 = vsub.s32 1, %v819
      %v821 = vrot.slane %v603, %v820
      %v824 = vlaneseq
      %v825 = vshrl.u32 %v824, 7
      %v826 = vsub.s32 0, %v825
      %v827 = vrot.slane %v817, %v826
      %829 = vbcast.lane.b32.xlu0 %v827, 256
      %v830 = vpop.permute.xlu0 %829
      %s832 = sor.u32 256, 8
      %833 = vbcast.lane.b32.xlu0 %v827, %s832
      %v834 = vpop.permute.xlu0 %833
      %s836 = sor.u32 256, 16
      %837 = vbcast.lane.b32.xlu0 %v827, %s836
      %v838 = vpop.permute.xlu0 %837
      %s840 = sor.u32 256, 24
      %841 = vbcast.lane.b32.xlu0 %v827, %s840
      %v842 = vpop.permute.xlu0 %841
      %s844 = sor.u32 256, 32
      %845 = vbcast.lane.b32.xlu0 %v827, %s844
      %v846 = vpop.permute.xlu0 %845
      %s848 = sor.u32 256, 40
      %849 = vbcast.lane.b32.xlu0 %v827, %s848
      %v850 = vpop.permute.xlu0 %849
      %s852 = sor.u32 256, 48
      %853 = vbcast.lane.b32.xlu0 %v827, %s852
      %v854 = vpop.permute.xlu0 %853
      %s856 = sor.u32 256, 56
      %857 = vbcast.lane.b32.xlu0 %v827, %s856
      %v858 = vpop.permute.xlu0 %857
      %s860 = sor.u32 256, 64
      %861 = vbcast.lane.b32.xlu0 %v827, %s860
      %v862 = vpop.permute.xlu0 %861
      %s864 = sor.u32 256, 72
      %865 = vbcast.lane.b32.xlu0 %v827, %s864
      %v866 = vpop.permute.xlu0 %865
      %s868 = sor.u32 256, 80
      %869 = vbcast.lane.b32.xlu0 %v827, %s868
      %v870 = vpop.permute.xlu0 %869
      %s872 = sor.u32 256, 88
      %873 = vbcast.lane.b32.xlu0 %v827, %s872
      %v874 = vpop.permute.xlu0 %873
      %s876 = sor.u32 256, 96
      %877 = vbcast.lane.b32.xlu0 %v827, %s876
      %v878 = vpop.permute.xlu0 %877
      %s880 = sor.u32 256, 104
      %881 = vbcast.lane.b32.xlu0 %v827, %s880
      %v882 = vpop.permute.xlu0 %881
      %s884 = sor.u32 256, 112
      %885 = vbcast.lane.b32.xlu0 %v827, %s884
      %v886 = vpop.permute.xlu0 %885
      %s888 = sor.u32 256, 120
      %889 = vbcast.lane.b32.xlu0 %v827, %s888
      %v890 = vpop.permute.xlu0 %889
      %v891 = vlaneseq
      %v892 = vshrl.u32 %v891, 7
      %v893 = vsub.s32 0, %v892
      %v894 = vrot.slane %v821, %v893
      %896 = vbcast.lane.b32.xlu0 %v894, 256
      %v897 = vpop.permute.xlu0 %896
      %s899 = sor.u32 256, 8
      %900 = vbcast.lane.b32.xlu0 %v894, %s899
      %v901 = vpop.permute.xlu0 %900
      %s903 = sor.u32 256, 16
      %904 = vbcast.lane.b32.xlu0 %v894, %s903
      %v905 = vpop.permute.xlu0 %904
      %s907 = sor.u32 256, 24
      %908 = vbcast.lane.b32.xlu0 %v894, %s907
      %v909 = vpop.permute.xlu0 %908
      %s911 = sor.u32 256, 32
      %912 = vbcast.lane.b32.xlu0 %v894, %s911
      %v913 = vpop.permute.xlu0 %912
      %s915 = sor.u32 256, 40
      %916 = vbcast.lane.b32.xlu0 %v894, %s915
      %v917 = vpop.permute.xlu0 %916
      %s919 = sor.u32 256, 48
      %920 = vbcast.lane.b32.xlu0 %v894, %s919
      %v921 = vpop.permute.xlu0 %920
      %s923 = sor.u32 256, 56
      %924 = vbcast.lane.b32.xlu0 %v894, %s923
      %v925 = vpop.permute.xlu0 %924
      %s927 = sor.u32 256, 64
      %928 = vbcast.lane.b32.xlu0 %v894, %s927
      %v929 = vpop.permute.xlu0 %928
      %s931 = sor.u32 256, 72
      %932 = vbcast.lane.b32.xlu0 %v894, %s931
      %v933 = vpop.permute.xlu0 %932
      %s935 = sor.u32 256, 80
      %936 = vbcast.lane.b32.xlu0 %v894, %s935
      %v937 = vpop.permute.xlu0 %936
      %s939 = sor.u32 256, 88
      %940 = vbcast.lane.b32.xlu0 %v894, %s939
      %v941 = vpop.permute.xlu0 %940
      %s943 = sor.u32 256, 96
      %944 = vbcast.lane.b32.xlu0 %v894, %s943
      %v945 = vpop.permute.xlu0 %944
      %s947 = sor.u32 256, 104
      %948 = vbcast.lane.b32.xlu0 %v894, %s947
      %v949 = vpop.permute.xlu0 %948
      %s951 = sor.u32 256, 112
      %952 = vbcast.lane.b32.xlu0 %v894, %s951
      %v953 = vpop.permute.xlu0 %952
      %s955 = sor.u32 256, 120
      %956 = vbcast.lane.b32.xlu0 %v894, %s955
      %v957 = vpop.permute.xlu0 %956
      %v958 = vmul.f32 %v830, 0.4204482
      %v959 = vmul.f32 %v834, 0.4204482
      %v960 = vmul.f32 %v838, 0.4204482
      %v961 = vmul.f32 %v842, 0.4204482
      %v962 = vmul.f32 %v846, 0.4204482
      %v963 = vmul.f32 %v850, 0.4204482
      %v964 = vmul.f32 %v854, 0.4204482
      %v965 = vmul.f32 %v858, 0.4204482
      %v966 = vmul.f32 %v862, 0.4204482
      %v967 = vmul.f32 %v866, 0.4204482
      %v968 = vmul.f32 %v870, 0.4204482
      %v969 = vmul.f32 %v874, 0.4204482
      %v970 = vmul.f32 %v878, 0.4204482
      %v971 = vmul.f32 %v882, 0.4204482
      %v972 = vmul.f32 %v886, 0.4204482
      %v973 = vmul.f32 %v890, 0.4204482
      %v974 = vmul.f32 %v897, 0.4204482
      %v975 = vmul.f32 %v901, 0.4204482
      %v976 = vmul.f32 %v905, 0.4204482
      %v977 = vmul.f32 %v909, 0.4204482
      %v978 = vmul.f32 %v913, 0.4204482
      %v979 = vmul.f32 %v917, 0.4204482
      %v980 = vmul.f32 %v921, 0.4204482
      %v981 = vmul.f32 %v925, 0.4204482
      %v982 = vmul.f32 %v929, 0.4204482
      %v983 = vmul.f32 %v933, 0.4204482
      %v984 = vmul.f32 %v937, 0.4204482
      %v985 = vmul.f32 %v941, 0.4204482
      %v986 = vmul.f32 %v945, 0.4204482
      %v987 = vmul.f32 %v949, 0.4204482
      %v988 = vmul.f32 %v953, 0.4204482
      %v989 = vmul.f32 %v957, 0.4204482
      %v990 = vmul.f32 %v538, %v958
      %v991 = vmul.f32 %v539, %v959
      %v992 = vmul.f32 %v540, %v960
      %v993 = vmul.f32 %v541, %v961
      %v994 = vmul.f32 %v542, %v962
      %v995 = vmul.f32 %v543, %v963
      %v996 = vmul.f32 %v544, %v964
      %v997 = vmul.f32 %v545, %v965
      %v998 = vmul.f32 %v546, %v966
      %v999 = vmul.f32 %v547, %v967
      %v1000 = vmul.f32 %v548, %v968
      %v1001 = vmul.f32 %v549, %v969
      %v1002 = vmul.f32 %v550, %v970
      %v1003 = vmul.f32 %v551, %v971
      %v1004 = vmul.f32 %v552, %v972
      %v1005 = vmul.f32 %v553, %v973
      %v1006 = vmul.f32 %v554, %v974
      %v1007 = vmul.f32 %v555, %v975
      %v1008 = vmul.f32 %v556, %v976
      %v1009 = vmul.f32 %v557, %v977
      %v1010 = vmul.f32 %v558, %v978
      %v1011 = vmul.f32 %v559, %v979
      %v1012 = vmul.f32 %v560, %v980
      %v1013 = vmul.f32 %v561, %v981
      %v1014 = vmul.f32 %v562, %v982
      %v1015 = vmul.f32 %v563, %v983
      %v1016 = vmul.f32 %v564, %v984
      %v1017 = vmul.f32 %v565, %v985
      %v1018 = vmul.f32 %v566, %v986
      %v1019 = vmul.f32 %v567, %v987
      %v1020 = vmul.f32 %v568, %v988
      %v1021 = vmul.f32 %v569, %v989
      %v1022 = vmul.f32 %v990, %v990
      %v1023 = vmul.f32 %v991, %v991
      %v1024 = vmul.f32 %v992, %v992
      %v1025 = vmul.f32 %v993, %v993
      %v1026 = vmul.f32 %v994, %v994
      %v1027 = vmul.f32 %v995, %v995
      %v1028 = vmul.f32 %v996, %v996
      %v1029 = vmul.f32 %v997, %v997
      %v1030 = vmul.f32 %v998, %v998
      %v1031 = vmul.f32 %v999, %v999
      %v1032 = vmul.f32 %v1000, %v1000
      %v1033 = vmul.f32 %v1001, %v1001
      %v1034 = vmul.f32 %v1002, %v1002
      %v1035 = vmul.f32 %v1003, %v1003
      %v1036 = vmul.f32 %v1004, %v1004
      %v1037 = vmul.f32 %v1005, %v1005
      %v1038 = vmul.f32 %v1006, %v1006
      %v1039 = vmul.f32 %v1007, %v1007
      %v1040 = vmul.f32 %v1008, %v1008
      %v1041 = vmul.f32 %v1009, %v1009
      %v1042 = vmul.f32 %v1010, %v1010
      %v1043 = vmul.f32 %v1011, %v1011
      %v1044 = vmul.f32 %v1012, %v1012
      %v1045 = vmul.f32 %v1013, %v1013
      %v1046 = vmul.f32 %v1014, %v1014
      %v1047 = vmul.f32 %v1015, %v1015
      %v1048 = vmul.f32 %v1016, %v1016
      %v1049 = vmul.f32 %v1017, %v1017
      %v1050 = vmul.f32 %v1018, %v1018
      %v1051 = vmul.f32 %v1019, %v1019
      %v1052 = vmul.f32 %v1020, %v1020
      %v1053 = vmul.f32 %v1021, %v1021
      %vm1054 = vcmask 261120
      %v1055 = vsel %vm1054, %v1022, 0.0
      %1056 = vadd.xlane.f32.xlu0 %v1055
      %v1057 = vpop.xlane.xlu0 %1056
      %v1058 = vsel %vm1054, %v1023, 0.0
      %1059 = vadd.xlane.f32.xlu0 %v1058
      %v1060 = vpop.xlane.xlu0 %1059
      %v1061 = vsel %vm1054, %v1024, 0.0
      %1062 = vadd.xlane.f32.xlu0 %v1061
      %v1063 = vpop.xlane.xlu0 %1062
      %v1064 = vsel %vm1054, %v1025, 0.0
      %1065 = vadd.xlane.f32.xlu0 %v1064
      %v1066 = vpop.xlane.xlu0 %1065
      %v1067 = vsel %vm1054, %v1026, 0.0
      %1068 = vadd.xlane.f32.xlu0 %v1067
      %v1069 = vpop.xlane.xlu0 %1068
      %v1070 = vsel %vm1054, %v1027, 0.0
      %1071 = vadd.xlane.f32.xlu0 %v1070
      %v1072 = vpop.xlane.xlu0 %1071
      %v1073 = vsel %vm1054, %v1028, 0.0
      %1074 = vadd.xlane.f32.xlu0 %v1073
      %v1075 = vpop.xlane.xlu0 %1074
      %v1076 = vsel %vm1054, %v1029, 0.0
      %1077 = vadd.xlane.f32.xlu0 %v1076
      %v1078 = vpop.xlane.xlu0 %1077
      %v1079 = vsel %vm1054, %v1030, 0.0
      %1080 = vadd.xlane.f32.xlu0 %v1079
      %v1081 = vpop.xlane.xlu0 %1080
      %v1082 = vsel %vm1054, %v1031, 0.0
      %1083 = vadd.xlane.f32.xlu0 %v1082
      %v1084 = vpop.xlane.xlu0 %1083
      %v1085 = vsel %vm1054, %v1032, 0.0
      %1086 = vadd.xlane.f32.xlu0 %v1085
      %v1087 = vpop.xlane.xlu0 %1086
      %v1088 = vsel %vm1054, %v1033, 0.0
      %1089 = vadd.xlane.f32.xlu0 %v1088
      %v1090 = vpop.xlane.xlu0 %1089
      %v1091 = vsel %vm1054, %v1034, 0.0
      %1092 = vadd.xlane.f32.xlu0 %v1091
      %v1093 = vpop.xlane.xlu0 %1092
      %v1094 = vsel %vm1054, %v1035, 0.0
      %1095 = vadd.xlane.f32.xlu0 %v1094
      %v1096 = vpop.xlane.xlu0 %1095
      %v1097 = vsel %vm1054, %v1036, 0.0
      %1098 = vadd.xlane.f32.xlu0 %v1097
      %v1099 = vpop.xlane.xlu0 %1098
      %v1100 = vsel %vm1054, %v1037, 0.0
      %1101 = vadd.xlane.f32.xlu0 %v1100
      %v1102 = vpop.xlane.xlu0 %1101
      %v1103 = vsel %vm1054, %v1038, 0.0
      %1104 = vadd.xlane.f32.xlu0 %v1103
      %v1105 = vpop.xlane.xlu0 %1104
      %v1106 = vsel %vm1054, %v1039, 0.0
      %1107 = vadd.xlane.f32.xlu0 %v1106
      %v1108 = vpop.xlane.xlu0 %1107
      %v1109 = vsel %vm1054, %v1040, 0.0
      %1110 = vadd.xlane.f32.xlu0 %v1109
      %v1111 = vpop.xlane.xlu0 %1110
      %v1112 = vsel %vm1054, %v1041, 0.0
      %1113 = vadd.xlane.f32.xlu0 %v1112
      %v1114 = vpop.xlane.xlu0 %1113
      %v1115 = vsel %vm1054, %v1042, 0.0
      %1116 = vadd.xlane.f32.xlu0 %v1115
      %v1117 = vpop.xlane.xlu0 %1116
      %v1118 = vsel %vm1054, %v1043, 0.0
      %1119 = vadd.xlane.f32.xlu0 %v1118
      %v1120 = vpop.xlane.xlu0 %1119
      %v1121 = vsel %vm1054, %v1044, 0.0
      %1122 = vadd.xlane.f32.xlu0 %v1121
      %v1123 = vpop.xlane.xlu0 %1122
      %v1124 = vsel %vm1054, %v1045, 0.0
      %1125 = vadd.xlane.f32.xlu0 %v1124
      %v1126 = vpop.xlane.xlu0 %1125
      %v1127 = vsel %vm1054, %v1046, 0.0
      %1128 = vadd.xlane.f32.xlu0 %v1127
      %v1129 = vpop.xlane.xlu0 %1128
      %v1130 = vsel %vm1054, %v1047, 0.0
      %1131 = vadd.xlane.f32.xlu0 %v1130
      %v1132 = vpop.xlane.xlu0 %1131
      %v1133 = vsel %vm1054, %v1048, 0.0
      %1134 = vadd.xlane.f32.xlu0 %v1133
      %v1135 = vpop.xlane.xlu0 %1134
      %v1136 = vsel %vm1054, %v1049, 0.0
      %1137 = vadd.xlane.f32.xlu0 %v1136
      %v1138 = vpop.xlane.xlu0 %1137
      %v1139 = vsel %vm1054, %v1050, 0.0
      %1140 = vadd.xlane.f32.xlu0 %v1139
      %v1141 = vpop.xlane.xlu0 %1140
      %v1142 = vsel %vm1054, %v1051, 0.0
      %1143 = vadd.xlane.f32.xlu0 %v1142
      %v1144 = vpop.xlane.xlu0 %1143
      %v1145 = vsel %vm1054, %v1052, 0.0
      %1146 = vadd.xlane.f32.xlu0 %v1145
      %v1147 = vpop.xlane.xlu0 %1146
      %v1148 = vsel %vm1054, %v1053, 0.0
      %1149 = vadd.xlane.f32.xlu0 %v1148
      %v1150 = vpop.xlane.xlu0 %1149
      %v1151 = vmul.f32 %v1057, 0.5
      %v1152 = vmul.f32 %v1060, 0.5
      %v1153 = vmul.f32 %v1063, 0.5
      %v1154 = vmul.f32 %v1066, 0.5
      %v1155 = vmul.f32 %v1069, 0.5
      %v1156 = vmul.f32 %v1072, 0.5
      %v1157 = vmul.f32 %v1075, 0.5
      %v1158 = vmul.f32 %v1078, 0.5
      %v1159 = vmul.f32 %v1081, 0.5
      %v1160 = vmul.f32 %v1084, 0.5
      %v1161 = vmul.f32 %v1087, 0.5
      %v1162 = vmul.f32 %v1090, 0.5
      %v1163 = vmul.f32 %v1093, 0.5
      %v1164 = vmul.f32 %v1096, 0.5
      %v1165 = vmul.f32 %v1099, 0.5
      %v1166 = vmul.f32 %v1102, 0.5
      %v1167 = vmul.f32 %v1105, 0.5
      %v1168 = vmul.f32 %v1108, 0.5
      %v1169 = vmul.f32 %v1111, 0.5
      %v1170 = vmul.f32 %v1114, 0.5
      %v1171 = vmul.f32 %v1117, 0.5
      %v1172 = vmul.f32 %v1120, 0.5
      %v1173 = vmul.f32 %v1123, 0.5
      %v1174 = vmul.f32 %v1126, 0.5
      %v1175 = vmul.f32 %v1129, 0.5
      %v1176 = vmul.f32 %v1132, 0.5
      %v1177 = vmul.f32 %v1135, 0.5
      %v1178 = vmul.f32 %v1138, 0.5
      %v1179 = vmul.f32 %v1141, 0.5
      %v1180 = vmul.f32 %v1144, 0.5
      %v1181 = vmul.f32 %v1147, 0.5
      %v1182 = vmul.f32 %v1150, 0.5
      %v1183 = vsub.f32 0.0, %v1151
      %v1184 = vsub.f32 0.0, %v1152
      %v1185 = vsub.f32 0.0, %v1153
      %v1186 = vsub.f32 0.0, %v1154
      %v1187 = vsub.f32 0.0, %v1155
      %v1188 = vsub.f32 0.0, %v1156
      %v1189 = vsub.f32 0.0, %v1157
      %v1190 = vsub.f32 0.0, %v1158
      %v1191 = vsub.f32 0.0, %v1159
      %v1192 = vsub.f32 0.0, %v1160
      %v1193 = vsub.f32 0.0, %v1161
      %v1194 = vsub.f32 0.0, %v1162
      %v1195 = vsub.f32 0.0, %v1163
      %v1196 = vsub.f32 0.0, %v1164
      %v1197 = vsub.f32 0.0, %v1165
      %v1198 = vsub.f32 0.0, %v1166
      %v1199 = vsub.f32 0.0, %v1167
      %v1200 = vsub.f32 0.0, %v1168
      %v1201 = vsub.f32 0.0, %v1169
      %v1202 = vsub.f32 0.0, %v1170
      %v1203 = vsub.f32 0.0, %v1171
      %v1204 = vsub.f32 0.0, %v1172
      %v1205 = vsub.f32 0.0, %v1173
      %v1206 = vsub.f32 0.0, %v1174
      %v1207 = vsub.f32 0.0, %v1175
      %v1208 = vsub.f32 0.0, %v1176
      %v1209 = vsub.f32 0.0, %v1177
      %v1210 = vsub.f32 0.0, %v1178
      %v1211 = vsub.f32 0.0, %v1179
      %v1212 = vsub.f32 0.0, %v1180
      %v1213 = vsub.f32 0.0, %v1181
      %v1214 = vsub.f32 0.0, %v1182
      %v1215 = vmul.f32 %v1183, 1.442695
      %v1216 = vpow.pop %v1215
      %v1217 = vmul.f32 %v1184, 1.442695
      %v1218 = vpow.pop %v1217
      %v1219 = vmul.f32 %v1185, 1.442695
      %v1220 = vpow.pop %v1219
      %v1221 = vmul.f32 %v1186, 1.442695
      %v1222 = vpow.pop %v1221
      %v1223 = vmul.f32 %v1187, 1.442695
      %v1224 = vpow.pop %v1223
      %v1225 = vmul.f32 %v1188, 1.442695
      %v1226 = vpow.pop %v1225
      %v1227 = vmul.f32 %v1189, 1.442695
      %v1228 = vpow.pop %v1227
      %v1229 = vmul.f32 %v1190, 1.442695
      %v1230 = vpow.pop %v1229
      %v1231 = vmul.f32 %v1191, 1.442695
      %v1232 = vpow.pop %v1231
      %v1233 = vmul.f32 %v1192, 1.442695
      %v1234 = vpow.pop %v1233
      %v1235 = vmul.f32 %v1193, 1.442695
      %v1236 = vpow.pop %v1235
      %v1237 = vmul.f32 %v1194, 1.442695
      %v1238 = vpow.pop %v1237
      %v1239 = vmul.f32 %v1195, 1.442695
      %v1240 = vpow.pop %v1239
      %v1241 = vmul.f32 %v1196, 1.442695
      %v1242 = vpow.pop %v1241
      %v1243 = vmul.f32 %v1197, 1.442695
      %v1244 = vpow.pop %v1243
      %v1245 = vmul.f32 %v1198, 1.442695
      %v1246 = vpow.pop %v1245
      %v1247 = vmul.f32 %v1199, 1.442695
      %v1248 = vpow.pop %v1247
      %v1249 = vmul.f32 %v1200, 1.442695
      %v1250 = vpow.pop %v1249
      %v1251 = vmul.f32 %v1201, 1.442695
      %v1252 = vpow.pop %v1251
      %v1253 = vmul.f32 %v1202, 1.442695
      %v1254 = vpow.pop %v1253
      %v1255 = vmul.f32 %v1203, 1.442695
      %v1256 = vpow.pop %v1255
      %v1257 = vmul.f32 %v1204, 1.442695
      %v1258 = vpow.pop %v1257
      %v1259 = vmul.f32 %v1205, 1.442695
      %v1260 = vpow.pop %v1259
      %v1261 = vmul.f32 %v1206, 1.442695
      %v1262 = vpow.pop %v1261
      %v1263 = vmul.f32 %v1207, 1.442695
      %v1264 = vpow.pop %v1263
      %v1265 = vmul.f32 %v1208, 1.442695
      %v1266 = vpow.pop %v1265
      %v1267 = vmul.f32 %v1209, 1.442695
      %v1268 = vpow.pop %v1267
      %v1269 = vmul.f32 %v1210, 1.442695
      %v1270 = vpow.pop %v1269
      %v1271 = vmul.f32 %v1211, 1.442695
      %v1272 = vpow.pop %v1271
      %v1273 = vmul.f32 %v1212, 1.442695
      %v1274 = vpow.pop %v1273
      %v1275 = vmul.f32 %v1213, 1.442695
      %v1276 = vpow.pop %v1275
      %v1277 = vmul.f32 %v1214, 1.442695
      %v1278 = vpow.pop %v1277
      %v1279 = vmul.f32 %v1216, %v830
      %v1280 = vmul.f32 %v1218, %v834
      %v1281 = vmul.f32 %v1220, %v838
      %v1282 = vmul.f32 %v1222, %v842
      %v1283 = vmul.f32 %v1224, %v846
      %v1284 = vmul.f32 %v1226, %v850
      %v1285 = vmul.f32 %v1228, %v854
      %v1286 = vmul.f32 %v1230, %v858
      %v1287 = vmul.f32 %v1232, %v862
      %v1288 = vmul.f32 %v1234, %v866
      %v1289 = vmul.f32 %v1236, %v870
      %v1290 = vmul.f32 %v1238, %v874
      %v1291 = vmul.f32 %v1240, %v878
      %v1292 = vmul.f32 %v1242, %v882
      %v1293 = vmul.f32 %v1244, %v886
      %v1294 = vmul.f32 %v1246, %v890
      %v1295 = vmul.f32 %v1248, %v897
      %v1296 = vmul.f32 %v1250, %v901
      %v1297 = vmul.f32 %v1252, %v905
      %v1298 = vmul.f32 %v1254, %v909
      %v1299 = vmul.f32 %v1256, %v913
      %v1300 = vmul.f32 %v1258, %v917
      %v1301 = vmul.f32 %v1260, %v921
      %v1302 = vmul.f32 %v1262, %v925
      %v1303 = vmul.f32 %v1264, %v929
      %v1304 = vmul.f32 %v1266, %v933
      %v1305 = vmul.f32 %v1268, %v937
      %v1306 = vmul.f32 %v1270, %v941
      %v1307 = vmul.f32 %v1272, %v945
      %v1308 = vmul.f32 %v1274, %v949
      %v1309 = vmul.f32 %v1276, %v953
      %v1310 = vmul.f32 %v1278, %v957
      %v1311 = vmul.f32 %v570, %v1279
      %v1312 = vmul.f32 %v571, %v1280
      %v1313 = vmul.f32 %v572, %v1281
      %v1314 = vmul.f32 %v573, %v1282
      %v1315 = vmul.f32 %v574, %v1283
      %v1316 = vmul.f32 %v575, %v1284
      %v1317 = vmul.f32 %v576, %v1285
      %v1318 = vmul.f32 %v577, %v1286
      %v1319 = vmul.f32 %v578, %v1287
      %v1320 = vmul.f32 %v579, %v1288
      %v1321 = vmul.f32 %v580, %v1289
      %v1322 = vmul.f32 %v581, %v1290
      %v1323 = vmul.f32 %v582, %v1291
      %v1324 = vmul.f32 %v583, %v1292
      %v1325 = vmul.f32 %v584, %v1293
      %v1326 = vmul.f32 %v585, %v1294
      %v1327 = vmul.f32 %v586, %v1295
      %v1328 = vmul.f32 %v587, %v1296
      %v1329 = vmul.f32 %v588, %v1297
      %v1330 = vmul.f32 %v589, %v1298
      %v1331 = vmul.f32 %v590, %v1299
      %v1332 = vmul.f32 %v591, %v1300
      %v1333 = vmul.f32 %v592, %v1301
      %v1334 = vmul.f32 %v593, %v1302
      %v1335 = vmul.f32 %v594, %v1303
      %v1336 = vmul.f32 %v595, %v1304
      %v1337 = vmul.f32 %v596, %v1305
      %v1338 = vmul.f32 %v597, %v1306
      %v1339 = vmul.f32 %v598, %v1307
      %v1340 = vmul.f32 %v599, %v1308
      %v1341 = vmul.f32 %v600, %v1309
      %v1342 = vmul.f32 %v601, %v1310
      %v1343 = vpack.c.bf16 %v1312, %v1311
      %v1344 = vpack.c.bf16 %v1314, %v1313
      %v1345 = vpack.c.bf16 %v1316, %v1315
      %v1346 = vpack.c.bf16 %v1318, %v1317
      %v1347 = vpack.c.bf16 %v1320, %v1319
      %v1348 = vpack.c.bf16 %v1322, %v1321
      %v1349 = vpack.c.bf16 %v1324, %v1323
      %v1350 = vpack.c.bf16 %v1326, %v1325
      %v1351 = vpack.c.bf16 %v1328, %v1327
      %v1352 = vpack.c.bf16 %v1330, %v1329
      %v1353 = vpack.c.bf16 %v1332, %v1331
      %v1354 = vpack.c.bf16 %v1334, %v1333
      %v1355 = vpack.c.bf16 %v1336, %v1335
      %v1356 = vpack.c.bf16 %v1338, %v1337
      %v1357 = vpack.c.bf16 %v1340, %v1339
      %v1358 = vpack.c.bf16 %v1342, %v1341
      %v1359 = vpack.c.bf16 %v782, %v781
      %v1360 = vpack.c.bf16 %v784, %v783
      %v1361 = vpack.c.bf16 %v786, %v785
      %v1362 = vpack.c.bf16 %v788, %v787
      %v1363 = vpack.c.bf16 %v790, %v789
      %v1364 = vpack.c.bf16 %v792, %v791
      %v1365 = vpack.c.bf16 %v794, %v793
      %v1366 = vpack.c.bf16 %v796, %v795
      %v1367 = vpack.c.bf16 %v798, %v797
      %v1368 = vpack.c.bf16 %v800, %v799
      %v1369 = vpack.c.bf16 %v802, %v801
      %v1370 = vpack.c.bf16 %v804, %v803
      %v1371 = vpack.c.bf16 %v806, %v805
      %v1372 = vpack.c.bf16 %v808, %v807
      %v1373 = vpack.c.bf16 %v810, %v809
      %v1374 = vpack.c.bf16 %v812, %v811
      %v1375 = vpack.c.bf16 %v991, %v990
      %v1376 = vpack.c.bf16 %v993, %v992
      %v1377 = vpack.c.bf16 %v995, %v994
      %v1378 = vpack.c.bf16 %v997, %v996
      %v1379 = vpack.c.bf16 %v999, %v998
      %v1380 = vpack.c.bf16 %v1001, %v1000
      %v1381 = vpack.c.bf16 %v1003, %v1002
      %v1382 = vpack.c.bf16 %v1005, %v1004
      %v1383 = vpack.c.bf16 %v1007, %v1006
      %v1384 = vpack.c.bf16 %v1009, %v1008
      %v1385 = vpack.c.bf16 %v1011, %v1010
      %v1386 = vpack.c.bf16 %v1013, %v1012
      %v1387 = vpack.c.bf16 %v1015, %v1014
      %v1388 = vpack.c.bf16 %v1017, %v1016
      %v1389 = vpack.c.bf16 %v1019, %v1018
      %v1390 = vpack.c.bf16 %v1021, %v1020
      %v1392 = vsel %vm1054, %v1359, 0
      %v1395 = vsel %vm1054, %v1360, 0
      %v1398 = vsel %vm1054, %v1361, 0
      %v1401 = vsel %vm1054, %v1362, 0
      %v1404 = vsel %vm1054, %v1363, 0
      %v1407 = vsel %vm1054, %v1364, 0
      %v1410 = vsel %vm1054, %v1365, 0
      %v1413 = vsel %vm1054, %v1366, 0
      %v1416 = vsel %vm1054, %v1367, 0
      %v1419 = vsel %vm1054, %v1368, 0
      %v1422 = vsel %vm1054, %v1369, 0
      %v1425 = vsel %vm1054, %v1370, 0
      %v1428 = vsel %vm1054, %v1371, 0
      %v1431 = vsel %vm1054, %v1372, 0
      %v1434 = vsel %vm1054, %v1373, 0
      %v1437 = vsel %vm1054, %v1374, 0
      %v1440 = vsel %vm1054, %v1375, 0
      %v1443 = vsel %vm1054, %v1376, 0
      %v1446 = vsel %vm1054, %v1377, 0
      %v1449 = vsel %vm1054, %v1378, 0
      %v1452 = vsel %vm1054, %v1379, 0
      %v1455 = vsel %vm1054, %v1380, 0
      %v1458 = vsel %vm1054, %v1381, 0
      %v1461 = vsel %vm1054, %v1382, 0
      %v1464 = vsel %vm1054, %v1383, 0
      %v1467 = vsel %vm1054, %v1384, 0
      %v1470 = vsel %vm1054, %v1385, 0
      %v1473 = vsel %vm1054, %v1386, 0
      %v1476 = vsel %vm1054, %v1387, 0
      %v1479 = vsel %vm1054, %v1388, 0
      %v1482 = vsel %vm1054, %v1389, 0
      %v1485 = vsel %vm1054, %v1390, 0
      %1487 = vmatprep.subr.bf16.mxu0 0
      %1488 = vmatpush1.bf16.xpose.msra.mxu0 %v1440
      %1489 = vmatprep.subr.bf16.mxu0 0
      %1490 = vmatpush1.bf16.xpose.msra.mxu0 %v1443
      %1491 = vmatprep.subr.bf16.mxu0 0
      %1492 = vmatpush1.bf16.xpose.msra.mxu0 %v1446
      %1493 = vmatprep.subr.bf16.mxu0 0
      %1494 = vmatpush1.bf16.xpose.msra.mxu0 %v1449
      %1495 = vmatprep.subr.bf16.mxu0 0
      %1496 = vmatpush1.bf16.xpose.msra.mxu0 %v1452
      %1497 = vmatprep.subr.bf16.mxu0 0
      %1498 = vmatpush1.bf16.xpose.msra.mxu0 %v1455
      %1499 = vmatprep.subr.bf16.mxu0 0
      %1500 = vmatpush1.bf16.xpose.msra.mxu0 %v1458
      %1501 = vmatprep.subr.bf16.mxu0 0
      %1502 = vmatpush1.bf16.xpose.msra.mxu0 %v1461
      %1503 = vmatprep.subr.bf16.mxu0 0
      %1504 = vmatpush1.bf16.xpose.msra.mxu0 %v1464
      %1505 = vmatprep.subr.bf16.mxu0 0
      %1506 = vmatpush1.bf16.xpose.msra.mxu0 %v1467
      %1507 = vmatprep.subr.bf16.mxu0 0
      %1508 = vmatpush1.bf16.xpose.msra.mxu0 %v1470
      %1509 = vmatprep.subr.bf16.mxu0 0
      %1510 = vmatpush1.bf16.xpose.msra.mxu0 %v1473
      %1511 = vmatprep.subr.bf16.mxu0 0
      %1512 = vmatpush1.bf16.xpose.msra.mxu0 %v1476
      %1513 = vmatprep.subr.bf16.mxu0 0
      %1514 = vmatpush1.bf16.xpose.msra.mxu0 %v1479
      %1515 = vmatprep.subr.bf16.mxu0 0
      %1516 = vmatpush1.bf16.xpose.msra.mxu0 %v1482
      %1517 = vmatprep.subr.bf16.mxu0 0
      %1518 = vmatpush1.bf16.xpose.msra.mxu0 %v1485
      %1519 = vmatprep.mubr.bf16.mxu0 0
      %1520 = vmatmul.mubr.bf16.gmra.mrb[0].mxu0 %v1392
      %v1521 = vpop.f32.mrb[0].mxu0
      %v1522 = vadd.f32 0.0, %v1521
      %v1523 = vpop.f32.mrb[0].mxu0
      %v1524 = vadd.f32 0.0, %v1523
      %v1525 = vpop.f32.mrb[0].mxu0
      %v1526 = vadd.f32 0.0, %v1525
      %v1527 = vpop.f32.mrb[0].mxu0
      %v1528 = vadd.f32 0.0, %v1527
      %1529 = vmatprep.mubr.bf16.mxu0 0
      %1530 = vmatmul.mubr.bf16.gmra.mrb[0].mxu0 %v1395
      %v1531 = vpop.f32.mrb[0].mxu0
      %v1532 = vadd.f32 0.0, %v1531
      %v1533 = vpop.f32.mrb[0].mxu0
      %v1534 = vadd.f32 0.0, %v1533
      %v1535 = vpop.f32.mrb[0].mxu0
      %v1536 = vadd.f32 0.0, %v1535
      %v1537 = vpop.f32.mrb[0].mxu0
      %v1538 = vadd.f32 0.0, %v1537
      %1539 = vmatprep.mubr.bf16.mxu0 0
      %1540 = vmatmul.mubr.bf16.gmra.mrb[0].mxu0 %v1398
      %v1541 = vpop.f32.mrb[0].mxu0
      %v1542 = vadd.f32 0.0, %v1541
      %v1543 = vpop.f32.mrb[0].mxu0
      %v1544 = vadd.f32 0.0, %v1543
      %v1545 = vpop.f32.mrb[0].mxu0
      %v1546 = vadd.f32 0.0, %v1545
      %v1547 = vpop.f32.mrb[0].mxu0
      %v1548 = vadd.f32 0.0, %v1547
      %1549 = vmatprep.mubr.bf16.mxu0 0
      %1550 = vmatmul.mubr.bf16.gmra.mrb[0].mxu0 %v1401
      %v1551 = vpop.f32.mrb[0].mxu0
      %v1552 = vadd.f32 0.0, %v1551
      %v1553 = vpop.f32.mrb[0].mxu0
      %v1554 = vadd.f32 0.0, %v1553
      %v1555 = vpop.f32.mrb[0].mxu0
      %v1556 = vadd.f32 0.0, %v1555
      %v1557 = vpop.f32.mrb[0].mxu0
      %v1558 = vadd.f32 0.0, %v1557
      %1559 = vmatprep.mubr.bf16.mxu0 0
      %1560 = vmatmul.mubr.bf16.gmra.mrb[0].mxu0 %v1404
      %v1561 = vpop.f32.mrb[0].mxu0
      %v1562 = vadd.f32 0.0, %v1561
      %v1563 = vpop.f32.mrb[0].mxu0
      %v1564 = vadd.f32 0.0, %v1563
      %v1565 = vpop.f32.mrb[0].mxu0
      %v1566 = vadd.f32 0.0, %v1565
      %v1567 = vpop.f32.mrb[0].mxu0
      %v1568 = vadd.f32 0.0, %v1567
      %1569 = vmatprep.mubr.bf16.mxu0 0
      %1570 = vmatmul.mubr.bf16.gmra.mrb[0].mxu0 %v1407
      %v1571 = vpop.f32.mrb[0].mxu0
      %v1572 = vadd.f32 0.0, %v1571
      %v1573 = vpop.f32.mrb[0].mxu0
      %v1574 = vadd.f32 0.0, %v1573
      %v1575 = vpop.f32.mrb[0].mxu0
      %v1576 = vadd.f32 0.0, %v1575
      %v1577 = vpop.f32.mrb[0].mxu0
      %v1578 = vadd.f32 0.0, %v1577
      %1579 = vmatprep.mubr.bf16.mxu0 0
      %1580 = vmatmul.mubr.bf16.gmra.mrb[0].mxu0 %v1410
      %v1581 = vpop.f32.mrb[0].mxu0
      %v1582 = vadd.f32 0.0, %v1581
      %v1583 = vpop.f32.mrb[0].mxu0
      %v1584 = vadd.f32 0.0, %v1583
      %v1585 = vpop.f32.mrb[0].mxu0
      %v1586 = vadd.f32 0.0, %v1585
      %v1587 = vpop.f32.mrb[0].mxu0
      %v1588 = vadd.f32 0.0, %v1587
      %1589 = vmatprep.mubr.bf16.mxu0 0
      %1590 = vmatmul.mubr.bf16.gmra.mrb[0].mxu0 %v1413
      %v1591 = vpop.f32.mrb[0].mxu0
      %v1592 = vadd.f32 0.0, %v1591
      %v1593 = vpop.f32.mrb[0].mxu0
      %v1594 = vadd.f32 0.0, %v1593
      %v1595 = vpop.f32.mrb[0].mxu0
      %v1596 = vadd.f32 0.0, %v1595
      %v1597 = vpop.f32.mrb[0].mxu0
      %v1598 = vadd.f32 0.0, %v1597
      %1599 = vmatprep.mubr.bf16.mxu0 0
      %1600 = vmatmul.mubr.bf16.gmra.mrb[0].mxu0 %v1416
      %v1601 = vpop.f32.mrb[0].mxu0
      %v1602 = vadd.f32 0.0, %v1601
      %v1603 = vpop.f32.mrb[0].mxu0
      %v1604 = vadd.f32 0.0, %v1603
      %v1605 = vpop.f32.mrb[0].mxu0
      %v1606 = vadd.f32 0.0, %v1605
      %v1607 = vpop.f32.mrb[0].mxu0
      %v1608 = vadd.f32 0.0, %v1607
      %1609 = vmatprep.mubr.bf16.mxu0 0
      %1610 = vmatmul.mubr.bf16.gmra.mrb[0].mxu0 %v1419
      %v1611 = vpop.f32.mrb[0].mxu0
      %v1612 = vadd.f32 0.0, %v1611
      %v1613 = vpop.f32.mrb[0].mxu0
      %v1614 = vadd.f32 0.0, %v1613
      %v1615 = vpop.f32.mrb[0].mxu0
      %v1616 = vadd.f32 0.0, %v1615
      %v1617 = vpop.f32.mrb[0].mxu0
      %v1618 = vadd.f32 0.0, %v1617
      %1619 = vmatprep.mubr.bf16.mxu0 0
      %1620 = vmatmul.mubr.bf16.gmra.mrb[0].mxu0 %v1422
      %v1621 = vpop.f32.mrb[0].mxu0
      %v1622 = vadd.f32 0.0, %v1621
      %v1623 = vpop.f32.mrb[0].mxu0
      %v1624 = vadd.f32 0.0, %v1623
      %v1625 = vpop.f32.mrb[0].mxu0
      %v1626 = vadd.f32 0.0, %v1625
      %v1627 = vpop.f32.mrb[0].mxu0
      %v1628 = vadd.f32 0.0, %v1627
      %1629 = vmatprep.mubr.bf16.mxu0 0
      %1630 = vmatmul.mubr.bf16.gmra.mrb[0].mxu0 %v1425
      %v1631 = vpop.f32.mrb[0].mxu0
      %v1632 = vadd.f32 0.0, %v1631
      %v1633 = vpop.f32.mrb[0].mxu0
      %v1634 = vadd.f32 0.0, %v1633
      %v1635 = vpop.f32.mrb[0].mxu0
      %v1636 = vadd.f32 0.0, %v1635
      %v1637 = vpop.f32.mrb[0].mxu0
      %v1638 = vadd.f32 0.0, %v1637
      %1639 = vmatprep.mubr.bf16.mxu0 0
      %1640 = vmatmul.mubr.bf16.gmra.mrb[0].mxu0 %v1428
      %v1641 = vpop.f32.mrb[0].mxu0
      %v1642 = vadd.f32 0.0, %v1641
      %v1643 = vpop.f32.mrb[0].mxu0
      %v1644 = vadd.f32 0.0, %v1643
      %v1645 = vpop.f32.mrb[0].mxu0
      %v1646 = vadd.f32 0.0, %v1645
      %v1647 = vpop.f32.mrb[0].mxu0
      %v1648 = vadd.f32 0.0, %v1647
      %1649 = vmatprep.mubr.bf16.mxu0 0
      %1650 = vmatmul.mubr.bf16.gmra.mrb[0].mxu0 %v1431
      %v1651 = vpop.f32.mrb[0].mxu0
      %v1652 = vadd.f32 0.0, %v1651
      %v1653 = vpop.f32.mrb[0].mxu0
      %v1654 = vadd.f32 0.0, %v1653
      %v1655 = vpop.f32.mrb[0].mxu0
      %v1656 = vadd.f32 0.0, %v1655
      %v1657 = vpop.f32.mrb[0].mxu0
      %v1658 = vadd.f32 0.0, %v1657
      %1659 = vmatprep.mubr.bf16.mxu0 0
      %1660 = vmatmul.mubr.bf16.gmra.mrb[0].mxu0 %v1434
      %v1661 = vpop.f32.mrb[0].mxu0
      %v1662 = vadd.f32 0.0, %v1661
      %v1663 = vpop.f32.mrb[0].mxu0
      %v1664 = vadd.f32 0.0, %v1663
      %v1665 = vpop.f32.mrb[0].mxu0
      %v1666 = vadd.f32 0.0, %v1665
      %v1667 = vpop.f32.mrb[0].mxu0
      %v1668 = vadd.f32 0.0, %v1667
      %1669 = vmatprep.mubr.bf16.mxu0 0
      %1670 = vmatmul.mubr.bf16.gmra.mrb[0].mxu0 %v1437
      %v1671 = vpop.f32.mrb[0].mxu0
      %v1672 = vadd.f32 0.0, %v1671
      %v1673 = vpop.f32.mrb[0].mxu0
      %v1674 = vadd.f32 0.0, %v1673
      %v1675 = vpop.f32.mrb[0].mxu0
      %v1676 = vadd.f32 0.0, %v1675
      %v1677 = vpop.f32.mrb[0].mxu0
      %v1678 = vadd.f32 0.0, %v1677
      %1679 = vdwg.mxu0
      %v1680 = vmul.f32 %v1522, 1.442695
      %v1681 = vpow.pop %v1680
      %v1682 = vmul.f32 %v1524, 1.442695
      %v1683 = vpow.pop %v1682
      %v1684 = vmul.f32 %v1526, 1.442695
      %v1685 = vpow.pop %v1684
      %v1686 = vmul.f32 %v1528, 1.442695
      %v1687 = vpow.pop %v1686
      %v1688 = vmul.f32 %v1532, 1.442695
      %v1689 = vpow.pop %v1688
      %v1690 = vmul.f32 %v1534, 1.442695
      %v1691 = vpow.pop %v1690
      %v1692 = vmul.f32 %v1536, 1.442695
      %v1693 = vpow.pop %v1692
      %v1694 = vmul.f32 %v1538, 1.442695
      %v1695 = vpow.pop %v1694
      %v1696 = vmul.f32 %v1542, 1.442695
      %v1697 = vpow.pop %v1696
      %v1698 = vmul.f32 %v1544, 1.442695
      %v1699 = vpow.pop %v1698
      %v1700 = vmul.f32 %v1546, 1.442695
      %v1701 = vpow.pop %v1700
      %v1702 = vmul.f32 %v1548, 1.442695
      %v1703 = vpow.pop %v1702
      %v1704 = vmul.f32 %v1552, 1.442695
      %v1705 = vpow.pop %v1704
      %v1706 = vmul.f32 %v1554, 1.442695
      %v1707 = vpow.pop %v1706
      %v1708 = vmul.f32 %v1556, 1.442695
      %v1709 = vpow.pop %v1708
      %v1710 = vmul.f32 %v1558, 1.442695
      %v1711 = vpow.pop %v1710
      %v1712 = vmul.f32 %v1562, 1.442695
      %v1713 = vpow.pop %v1712
      %v1714 = vmul.f32 %v1564, 1.442695
      %v1715 = vpow.pop %v1714
      %v1716 = vmul.f32 %v1566, 1.442695
      %v1717 = vpow.pop %v1716
      %v1718 = vmul.f32 %v1568, 1.442695
      %v1719 = vpow.pop %v1718
      %v1720 = vmul.f32 %v1572, 1.442695
      %v1721 = vpow.pop %v1720
      %v1722 = vmul.f32 %v1574, 1.442695
      %v1723 = vpow.pop %v1722
      %v1724 = vmul.f32 %v1576, 1.442695
      %v1725 = vpow.pop %v1724
      %v1726 = vmul.f32 %v1578, 1.442695
      %v1727 = vpow.pop %v1726
      %v1728 = vmul.f32 %v1582, 1.442695
      %v1729 = vpow.pop %v1728
      %v1730 = vmul.f32 %v1584, 1.442695
      %v1731 = vpow.pop %v1730
      %v1732 = vmul.f32 %v1586, 1.442695
      %v1733 = vpow.pop %v1732
      %v1734 = vmul.f32 %v1588, 1.442695
      %v1735 = vpow.pop %v1734
      %v1736 = vmul.f32 %v1592, 1.442695
      %v1737 = vpow.pop %v1736
      %v1738 = vmul.f32 %v1594, 1.442695
      %v1739 = vpow.pop %v1738
      %v1740 = vmul.f32 %v1596, 1.442695
      %v1741 = vpow.pop %v1740
      %v1742 = vmul.f32 %v1598, 1.442695
      %v1743 = vpow.pop %v1742
      %v1744 = vmul.f32 %v1602, 1.442695
      %v1745 = vpow.pop %v1744
      %v1746 = vmul.f32 %v1604, 1.442695
      %v1747 = vpow.pop %v1746
      %v1748 = vmul.f32 %v1606, 1.442695
      %v1749 = vpow.pop %v1748
      %v1750 = vmul.f32 %v1608, 1.442695
      %v1751 = vpow.pop %v1750
      %v1752 = vmul.f32 %v1612, 1.442695
      %v1753 = vpow.pop %v1752
      %v1754 = vmul.f32 %v1614, 1.442695
      %v1755 = vpow.pop %v1754
      %v1756 = vmul.f32 %v1616, 1.442695
      %v1757 = vpow.pop %v1756
      %v1758 = vmul.f32 %v1618, 1.442695
      %v1759 = vpow.pop %v1758
      %v1760 = vmul.f32 %v1622, 1.442695
      %v1761 = vpow.pop %v1760
      %v1762 = vmul.f32 %v1624, 1.442695
      %v1763 = vpow.pop %v1762
      %v1764 = vmul.f32 %v1626, 1.442695
      %v1765 = vpow.pop %v1764
      %v1766 = vmul.f32 %v1628, 1.442695
      %v1767 = vpow.pop %v1766
      %v1768 = vmul.f32 %v1632, 1.442695
      %v1769 = vpow.pop %v1768
      %v1770 = vmul.f32 %v1634, 1.442695
      %v1771 = vpow.pop %v1770
      %v1772 = vmul.f32 %v1636, 1.442695
      %v1773 = vpow.pop %v1772
      %v1774 = vmul.f32 %v1638, 1.442695
      %v1775 = vpow.pop %v1774
      %v1776 = vmul.f32 %v1642, 1.442695
      %v1777 = vpow.pop %v1776
      %v1778 = vmul.f32 %v1644, 1.442695
      %v1779 = vpow.pop %v1778
      %v1780 = vmul.f32 %v1646, 1.442695
      %v1781 = vpow.pop %v1780
      %v1782 = vmul.f32 %v1648, 1.442695
      %v1783 = vpow.pop %v1782
      %v1784 = vmul.f32 %v1652, 1.442695
      %v1785 = vpow.pop %v1784
      %v1786 = vmul.f32 %v1654, 1.442695
      %v1787 = vpow.pop %v1786
      %v1788 = vmul.f32 %v1656, 1.442695
      %v1789 = vpow.pop %v1788
      %v1790 = vmul.f32 %v1658, 1.442695
      %v1791 = vpow.pop %v1790
      %v1792 = vmul.f32 %v1662, 1.442695
      %v1793 = vpow.pop %v1792
      %v1794 = vmul.f32 %v1664, 1.442695
      %v1795 = vpow.pop %v1794
      %v1796 = vmul.f32 %v1666, 1.442695
      %v1797 = vpow.pop %v1796
      %v1798 = vmul.f32 %v1668, 1.442695
      %v1799 = vpow.pop %v1798
      %v1800 = vmul.f32 %v1672, 1.442695
      %v1801 = vpow.pop %v1800
      %v1802 = vmul.f32 %v1674, 1.442695
      %v1803 = vpow.pop %v1802
      %v1804 = vmul.f32 %v1676, 1.442695
      %v1805 = vpow.pop %v1804
      %v1806 = vmul.f32 %v1678, 1.442695
      %v1807 = vpow.pop %v1806
      %v1808 = vld [vmem:[#allocation2] sm:$0xff]
      %v1809 = vld [vmem:[#allocation2 + $0x8] sm:$0xff]
      %v1810 = vld [vmem:[#allocation2 + $0x10] sm:$0xff]
      %v1811 = vld [vmem:[#allocation2 + $0x18] sm:$0xff]
      %v1812 = vld [vmem:[#allocation2 + $0x20] sm:$0xff]
      %v1813 = vld [vmem:[#allocation2 + $0x28] sm:$0xff]
      %v1814 = vld [vmem:[#allocation2 + $0x30] sm:$0xff]
      %v1815 = vld [vmem:[#allocation2 + $0x38] sm:$0xff]
      %v1816 = vld [vmem:[#allocation2 + $0x40] sm:$0xff]
      %v1817 = vld [vmem:[#allocation2 + $0x48] sm:$0xff]
      %v1818 = vld [vmem:[#allocation2 + $0x50] sm:$0xff]
      %v1819 = vld [vmem:[#allocation2 + $0x58] sm:$0xff]
      %v1820 = vld [vmem:[#allocation2 + $0x60] sm:$0xff]
      %v1821 = vld [vmem:[#allocation2 + $0x68] sm:$0xff]
      %v1822 = vld [vmem:[#allocation2 + $0x70] sm:$0xff]
      %v1823 = vld [vmem:[#allocation2 + $0x78] sm:$0xff]
      %v1824 = vld [vmem:[#allocation2 + $0x80] sm:$0xff]
      %v1825 = vld [vmem:[#allocation2 + $0x88] sm:$0xff]
      %v1826 = vld [vmem:[#allocation2 + $0x90] sm:$0xff]
      %v1827 = vld [vmem:[#allocation2 + $0x98] sm:$0xff]
      %v1828 = vld [vmem:[#allocation2 + $0xa0] sm:$0xff]
      %v1829 = vld [vmem:[#allocation2 + $0xa8] sm:$0xff]
      %v1830 = vld [vmem:[#allocation2 + $0xb0] sm:$0xff]
      %v1831 = vld [vmem:[#allocation2 + $0xb8] sm:$0xff]
      %v1832 = vld [vmem:[#allocation2 + $0xc0] sm:$0xff]
      %v1833 = vld [vmem:[#allocation2 + $0xc8] sm:$0xff]
      %v1834 = vld [vmem:[#allocation2 + $0xd0] sm:$0xff]
      %v1835 = vld [vmem:[#allocation2 + $0xd8] sm:$0xff]
      %v1836 = vld [vmem:[#allocation2 + $0xe0] sm:$0xff]
      %v1837 = vld [vmem:[#allocation2 + $0xe8] sm:$0xff]
      %v1838 = vld [vmem:[#allocation2 + $0xf0] sm:$0xff]
      %v1839 = vld [vmem:[#allocation2 + $0xf8] sm:$0xff]
      %v1840 = vpack.c.bf16 %v1685, %v1681
      %v1841 = vpack.c.bf16 %v1687, %v1683
      %v1842 = vpack.c.bf16 %v1693, %v1689
      %v1843 = vpack.c.bf16 %v1695, %v1691
      %v1844 = vpack.c.bf16 %v1701, %v1697
      %v1845 = vpack.c.bf16 %v1703, %v1699
      %v1846 = vpack.c.bf16 %v1709, %v1705
      %v1847 = vpack.c.bf16 %v1711, %v1707
      %v1848 = vpack.c.bf16 %v1717, %v1713
      %v1849 = vpack.c.bf16 %v1719, %v1715
      %v1850 = vpack.c.bf16 %v1725, %v1721
      %v1851 = vpack.c.bf16 %v1727, %v1723
      %v1852 = vpack.c.bf16 %v1733, %v1729
      %v1853 = vpack.c.bf16 %v1735, %v1731
      %v1854 = vpack.c.bf16 %v1741, %v1737
      %v1855 = vpack.c.bf16 %v1743, %v1739
      %v1856 = vpack.c.bf16 %v1749, %v1745
      %v1857 = vpack.c.bf16 %v1751, %v1747
      %v1858 = vpack.c.bf16 %v1757, %v1753
      %v1859 = vpack.c.bf16 %v1759, %v1755
      %v1860 = vpack.c.bf16 %v1765, %v1761
      %v1861 = vpack.c.bf16 %v1767, %v1763
      %v1862 = vpack.c.bf16 %v1773, %v1769
      %v1863 = vpack.c.bf16 %v1775, %v1771
      %v1864 = vpack.c.bf16 %v1781, %v1777
      %v1865 = vpack.c.bf16 %v1783, %v1779
      %v1866 = vpack.c.bf16 %v1789, %v1785
      %v1867 = vpack.c.bf16 %v1791, %v1787
      %v1868 = vpack.c.bf16 %v1797, %v1793
      %v1869 = vpack.c.bf16 %v1799, %v1795
      %v1870 = vpack.c.bf16 %v1805, %v1801
      %v1871 = vpack.c.bf16 %v1807, %v1803
      %1872 = vmatprep.subr.bf16.mxu0 0
      %1873 = vmatpush1.bf16.msra.mxu0 %v1343
      %1874 = vmatprep.subr.bf16.mxu0 0
      %1875 = vmatpush1.bf16.msra.mxu0 %v1344
      %1876 = vmatprep.subr.bf16.mxu0 0
      %1877 = vmatpush1.bf16.msra.mxu0 %v1345
      %1878 = vmatprep.subr.bf16.mxu0 0
      %1879 = vmatpush1.bf16.msra.mxu0 %v1346
      %1880 = vmatprep.subr.bf16.mxu0 0
      %1881 = vmatpush1.bf16.msra.mxu0 %v1347
      %1882 = vmatprep.subr.bf16.mxu0 0
      %1883 = vmatpush1.bf16.msra.mxu0 %v1348
      %1884 = vmatprep.subr.bf16.mxu0 0
      %1885 = vmatpush1.bf16.msra.mxu0 %v1349
      %1886 = vmatprep.subr.bf16.mxu0 0
      %1887 = vmatpush1.bf16.msra.mxu0 %v1350
      %1888 = vmatprep.subr.bf16.mxu0 0
      %1889 = vmatpush1.bf16.msra.mxu0 %v1351
      %1890 = vmatprep.subr.bf16.mxu0 0
      %1891 = vmatpush1.bf16.msra.mxu0 %v1352
      %1892 = vmatprep.subr.bf16.mxu0 0
      %1893 = vmatpush1.bf16.msra.mxu0 %v1353
      %1894 = vmatprep.subr.bf16.mxu0 0
      %1895 = vmatpush1.bf16.msra.mxu0 %v1354
      %1896 = vmatprep.subr.bf16.mxu0 0
      %1897 = vmatpush1.bf16.msra.mxu0 %v1355
      %1898 = vmatprep.subr.bf16.mxu0 0
      %1899 = vmatpush1.bf16.msra.mxu0 %v1356
      %1900 = vmatprep.subr.bf16.mxu0 0
      %1901 = vmatpush1.bf16.msra.mxu0 %v1357
      %1902 = vmatprep.subr.bf16.mxu0 0
      %1903 = vmatpush1.bf16.msra.mxu0 %v1358
      %1904 = vmatprep.mubr.bf16.mxu0 %v1841
      %1905 = vmatmul.mubr.bf16.gmra.mrb[0].mxu0 %v1840
      %v1906 = vpop.f32.mrb[0].mxu0
      %v1907 = vadd.f32 0.0, %v1906
      %v1908 = vpop.f32.mrb[0].mxu0
      %v1909 = vpop.f32.mrb[0].mxu0
      %v1910 = vadd.f32 0.0, %v1909
      %v1911 = vpop.f32.mrb[0].mxu0
      %1912 = vmatprep.mubr.bf16.mxu0 %v1843
      %1913 = vmatmul.mubr.bf16.gmra.mrb[0].mxu0 %v1842
      %v1914 = vpop.f32.mrb[0].mxu0
      %v1915 = vadd.f32 0.0, %v1914
      %v1916 = vpop.f32.mrb[0].mxu0
      %v1917 = vpop.f32.mrb[0].mxu0
      %v1918 = vadd.f32 0.0, %v1917
      %v1919 = vpop.f32.mrb[0].mxu0
      %1920 = vmatprep.mubr.bf16.mxu0 %v1845
      %1921 = vmatmul.mubr.bf16.gmra.mrb[0].mxu0 %v1844
      %v1922 = vpop.f32.mrb[0].mxu0
      %v1923 = vadd.f32 0.0, %v1922
      %v1924 = vpop.f32.mrb[0].mxu0
      %v1925 = vpop.f32.mrb[0].mxu0
      %v1926 = vadd.f32 0.0, %v1925
      %v1927 = vpop.f32.mrb[0].mxu0
      %1928 = vmatprep.mubr.bf16.mxu0 %v1847
      %1929 = vmatmul.mubr.bf16.gmra.mrb[0].mxu0 %v1846
      %v1930 = vpop.f32.mrb[0].mxu0
      %v1931 = vadd.f32 0.0, %v1930
      %v1932 = vpop.f32.mrb[0].mxu0
      %v1933 = vpop.f32.mrb[0].mxu0
      %v1934 = vadd.f32 0.0, %v1933
      %v1935 = vpop.f32.mrb[0].mxu0
      %1936 = vmatprep.mubr.bf16.mxu0 %v1849
      %1937 = vmatmul.mubr.bf16.gmra.mrb[0].mxu0 %v1848
      %v1938 = vpop.f32.mrb[0].mxu0
      %v1939 = vadd.f32 0.0, %v1938
      %v1940 = vpop.f32.mrb[0].mxu0
      %v1941 = vpop.f32.mrb[0].mxu0
      %v1942 = vadd.f32 0.0, %v1941
      %v1943 = vpop.f32.mrb[0].mxu0
      %1944 = vmatprep.mubr.bf16.mxu0 %v1851
      %1945 = vmatmul.mubr.bf16.gmra.mrb[0].mxu0 %v1850
      %v1946 = vpop.f32.mrb[0].mxu0
      %v1947 = vadd.f32 0.0, %v1946
      %v1948 = vpop.f32.mrb[0].mxu0
      %v1949 = vpop.f32.mrb[0].mxu0
      %v1950 = vadd.f32 0.0, %v1949
      %v1951 = vpop.f32.mrb[0].mxu0
      %1952 = vmatprep.mubr.bf16.mxu0 %v1853
      %1953 = vmatmul.mubr.bf16.gmra.mrb[0].mxu0 %v1852
      %v1954 = vpop.f32.mrb[0].mxu0
      %v1955 = vadd.f32 0.0, %v1954
      %v1956 = vpop.f32.mrb[0].mxu0
      %v1957 = vpop.f32.mrb[0].mxu0
      %v1958 = vadd.f32 0.0, %v1957
      %v1959 = vpop.f32.mrb[0].mxu0
      %1960 = vmatprep.mubr.bf16.mxu0 %v1855
      %1961 = vmatmul.mubr.bf16.gmra.mrb[0].mxu0 %v1854
      %v1962 = vpop.f32.mrb[0].mxu0
      %v1963 = vadd.f32 0.0, %v1962
      %v1964 = vpop.f32.mrb[0].mxu0
      %v1965 = vpop.f32.mrb[0].mxu0
      %v1966 = vadd.f32 0.0, %v1965
      %v1967 = vpop.f32.mrb[0].mxu0
      %1968 = vmatprep.mubr.bf16.mxu0 %v1857
      %1969 = vmatmul.mubr.bf16.gmra.mrb[0].mxu0 %v1856
      %v1970 = vpop.f32.mrb[0].mxu0
      %v1971 = vadd.f32 0.0, %v1970
      %v1972 = vpop.f32.mrb[0].mxu0
      %v1973 = vpop.f32.mrb[0].mxu0
      %v1974 = vadd.f32 0.0, %v1973
      %v1975 = vpop.f32.mrb[0].mxu0
      %1976 = vmatprep.mubr.bf16.mxu0 %v1859
      %1977 = vmatmul.mubr.bf16.gmra.mrb[0].mxu0 %v1858
      %v1978 = vpop.f32.mrb[0].mxu0
      %v1979 = vadd.f32 0.0, %v1978
      %v1980 = vpop.f32.mrb[0].mxu0
      %v1981 = vpop.f32.mrb[0].mxu0
      %v1982 = vadd.f32 0.0, %v1981
      %v1983 = vpop.f32.mrb[0].mxu0
      %1984 = vmatprep.mubr.bf16.mxu0 %v1861
      %1985 = vmatmul.mubr.bf16.gmra.mrb[0].mxu0 %v1860
      %v1986 = vpop.f32.mrb[0].mxu0
      %v1987 = vadd.f32 0.0, %v1986
      %v1988 = vpop.f32.mrb[0].mxu0
      %v1989 = vpop.f32.mrb[0].mxu0
      %v1990 = vadd.f32 0.0, %v1989
      %v1991 = vpop.f32.mrb[0].mxu0
      %1992 = vmatprep.mubr.bf16.mxu0 %v1863
      %1993 = vmatmul.mubr.bf16.gmra.mrb[0].mxu0 %v1862
      %v1994 = vpop.f32.mrb[0].mxu0
      %v1995 = vadd.f32 0.0, %v1994
      %v1996 = vpop.f32.mrb[0].mxu0
      %v1997 = vpop.f32.mrb[0].mxu0
      %v1998 = vadd.f32 0.0, %v1997
      %v1999 = vpop.f32.mrb[0].mxu0
      %2000 = vmatprep.mubr.bf16.mxu0 %v1865
      %2001 = vmatmul.mubr.bf16.gmra.mrb[0].mxu0 %v1864
      %v2002 = vpop.f32.mrb[0].mxu0
      %v2003 = vadd.f32 0.0, %v2002
      %v2004 = vpop.f32.mrb[0].mxu0
      %v2005 = vpop.f32.mrb[0].mxu0
      %v2006 = vadd.f32 0.0, %v2005
      %v2007 = vpop.f32.mrb[0].mxu0
      %2008 = vmatprep.mubr.bf16.mxu0 %v1867
      %2009 = vmatmul.mubr.bf16.gmra.mrb[0].mxu0 %v1866
      %v2010 = vpop.f32.mrb[0].mxu0
      %v2011 = vadd.f32 0.0, %v2010
      %v2012 = vpop.f32.mrb[0].mxu0
      %v2013 = vpop.f32.mrb[0].mxu0
      %v2014 = vadd.f32 0.0, %v2013
      %v2015 = vpop.f32.mrb[0].mxu0
      %2016 = vmatprep.mubr.bf16.mxu0 %v1869
      %2017 = vmatmul.mubr.bf16.gmra.mrb[0].mxu0 %v1868
      %v2018 = vpop.f32.mrb[0].mxu0
      %v2019 = vadd.f32 0.0, %v2018
      %v2020 = vpop.f32.mrb[0].mxu0
      %v2021 = vpop.f32.mrb[0].mxu0
      %v2022 = vadd.f32 0.0, %v2021
      %v2023 = vpop.f32.mrb[0].mxu0
      %2024 = vmatprep.mubr.bf16.mxu0 %v1871
      %2025 = vmatmul.mubr.bf16.gmra.mrb[0].mxu0 %v1870
      %v2026 = vpop.f32.mrb[0].mxu0
      %v2027 = vadd.f32 0.0, %v2026
      %v2028 = vpop.f32.mrb[0].mxu0
      %v2029 = vpop.f32.mrb[0].mxu0
      %v2030 = vadd.f32 0.0, %v2029
      %v2031 = vpop.f32.mrb[0].mxu0
      %2032 = vdwg.mxu0
      %v2033 = vadd.f32 %v1808, %v1907
      %v2034 = vadd.f32 %v1809, %v1910
      %v2035 = vadd.f32 %v1810, %v1915
      %v2036 = vadd.f32 %v1811, %v1918
      %v2037 = vadd.f32 %v1812, %v1923
      %v2038 = vadd.f32 %v1813, %v1926
      %v2039 = vadd.f32 %v1814, %v1931
      %v2040 = vadd.f32 %v1815, %v1934
      %v2041 = vadd.f32 %v1816, %v1939
      %v2042 = vadd.f32 %v1817, %v1942
      %v2043 = vadd.f32 %v1818, %v1947
      %v2044 = vadd.f32 %v1819, %v1950
      %v2045 = vadd.f32 %v1820, %v1955
      %v2046 = vadd.f32 %v1821, %v1958
      %v2047 = vadd.f32 %v1822, %v1963
      %v2048 = vadd.f32 %v1823, %v1966
      %v2049 = vadd.f32 %v1824, %v1971
      %v2050 = vadd.f32 %v1825, %v1974
      %v2051 = vadd.f32 %v1826, %v1979
      %v2052 = vadd.f32 %v1827, %v1982
      %v2053 = vadd.f32 %v1828, %v1987
      %v2054 = vadd.f32 %v1829, %v1990
      %v2055 = vadd.f32 %v1830, %v1995
      %v2056 = vadd.f32 %v1831, %v1998
      %v2057 = vadd.f32 %v1832, %v2003
      %v2058 = vadd.f32 %v1833, %v2006
      %v2059 = vadd.f32 %v1834, %v2011
      %v2060 = vadd.f32 %v1835, %v2014
      %v2061 = vadd.f32 %v1836, %v2019
      %v2062 = vadd.f32 %v1837, %v2022
      %v2063 = vadd.f32 %v1838, %v2027
      %v2064 = vadd.f32 %v1839, %v2030
      %2065 = vst.msk [vmem:[#allocation2] sm:$0xff] %vm1054, %v2033
      %2066 = vst.msk [vmem:[#allocation2 + $0x8] sm:$0xff] %vm1054, %v2034
      %2067 = vst.msk [vmem:[#allocation2 + $0x10] sm:$0xff] %vm1054, %v2035
      %2068 = vst.msk [vmem:[#allocation2 + $0x18] sm:$0xff] %vm1054, %v2036
      %2069 = vst.msk [vmem:[#allocation2 + $0x20] sm:$0xff] %vm1054, %v2037
      %2070 = vst.msk [vmem:[#allocation2 + $0x28] sm:$0xff] %vm1054, %v2038
      %2071 = vst.msk [vmem:[#allocation2 + $0x30] sm:$0xff] %vm1054, %v2039
      %2072 = vst.msk [vmem:[#allocation2 + $0x38] sm:$0xff] %vm1054, %v2040
      %2073 = vst.msk [vmem:[#allocation2 + $0x40] sm:$0xff] %vm1054, %v2041
      %2074 = vst.msk [vmem:[#allocation2 + $0x48] sm:$0xff] %vm1054, %v2042
      %2075 = vst.msk [vmem:[#allocation2 + $0x50] sm:$0xff] %vm1054, %v2043
      %2076 = vst.msk [vmem:[#allocation2 + $0x58] sm:$0xff] %vm1054, %v2044
      %2077 = vst.msk [vmem:[#allocation2 + $0x60] sm:$0xff] %vm1054, %v2045
      %2078 = vst.msk [vmem:[#allocation2 + $0x68] sm:$0xff] %vm1054, %v2046
      %2079 = vst.msk [vmem:[#allocation2 + $0x70] sm:$0xff] %vm1054, %v2047
      %2080 = vst.msk [vmem:[#allocation2 + $0x78] sm:$0xff] %vm1054, %v2048
      %2081 = vst.msk [vmem:[#allocation2 + $0x80] sm:$0xff] %vm1054, %v2049
      %2082 = vst.msk [vmem:[#allocation2 + $0x88] sm:$0xff] %vm1054, %v2050
      %2083 = vst.msk [vmem:[#allocation2 + $0x90] sm:$0xff] %vm1054, %v2051
      %2084 = vst.msk [vmem:[#allocation2 + $0x98] sm:$0xff] %vm1054, %v2052
      %2085 = vst.msk [vmem:[#allocation2 + $0xa0] sm:$0xff] %vm1054, %v2053
      %2086 = vst.msk [vmem:[#allocation2 + $0xa8] sm:$0xff] %vm1054, %v2054
      %2087 = vst.msk [vmem:[#allocation2 + $0xb0] sm:$0xff] %vm1054, %v2055
      %2088 = vst.msk [vmem:[#allocation2 + $0xb8] sm:$0xff] %vm1054, %v2056
      %2089 = vst.msk [vmem:[#allocation2 + $0xc0] sm:$0xff] %vm1054, %v2057
      %2090 = vst.msk [vmem:[#allocation2 + $0xc8] sm:$0xff] %vm1054, %v2058
      %2091 = vst.msk [vmem:[#allocation2 + $0xd0] sm:$0xff] %vm1054, %v2059
      %2092 = vst.msk [vmem:[#allocation2 + $0xd8] sm:$0xff] %vm1054, %v2060
      %2093 = vst.msk [vmem:[#allocation2 + $0xe0] sm:$0xff] %vm1054, %v2061
      %2094 = vst.msk [vmem:[#allocation2 + $0xe8] sm:$0xff] %vm1054, %v2062
      %2095 = vst.msk [vmem:[#allocation2 + $0xf0] sm:$0xff] %vm1054, %v2063
      %2096 = vst.msk [vmem:[#allocation2 + $0xf8] sm:$0xff] %vm1054, %v2064
      %p2097 = scmp.eq.s32.totalorder %s25, 1
      // Predicated region
      $region45: #{tpu_custom_call.1} parent=39 // pred_check
        %p2098 = pneg %p2097
      $region46: #{tpu_custom_call.1} parent=39 // pred_check_branch
        %2100 = sbr.rel (%p2098) target = $region48
      $region47: #{tpu_custom_call.1} parent=39 // pred_region
        %v2101 = vmul.f32 %v781, %v781
        %v2102 = vmul.f32 %v782, %v782
        %v2103 = vmul.f32 %v783, %v783
        %v2104 = vmul.f32 %v784, %v784
        %v2105 = vmul.f32 %v785, %v785
        %v2106 = vmul.f32 %v786, %v786
        %v2107 = vmul.f32 %v787, %v787
        %v2108 = vmul.f32 %v788, %v788
        %v2109 = vmul.f32 %v789, %v789
        %v2110 = vmul.f32 %v790, %v790
        %v2111 = vmul.f32 %v791, %v791
        %v2112 = vmul.f32 %v792, %v792
        %v2113 = vmul.f32 %v793, %v793
        %v2114 = vmul.f32 %v794, %v794
        %v2115 = vmul.f32 %v795, %v795
        %v2116 = vmul.f32 %v796, %v796
        %v2117 = vmul.f32 %v797, %v797
        %v2118 = vmul.f32 %v798, %v798
        %v2119 = vmul.f32 %v799, %v799
        %v2120 = vmul.f32 %v800, %v800
        %v2121 = vmul.f32 %v801, %v801
        %v2122 = vmul.f32 %v802, %v802
        %v2123 = vmul.f32 %v803, %v803
        %v2124 = vmul.f32 %v804, %v804
        %v2125 = vmul.f32 %v805, %v805
        %v2126 = vmul.f32 %v806, %v806
        %v2127 = vmul.f32 %v807, %v807
        %v2128 = vmul.f32 %v808, %v808
        %v2129 = vmul.f32 %v809, %v809
        %v2130 = vmul.f32 %v810, %v810
        %v2131 = vmul.f32 %v811, %v811
        %v2132 = vmul.f32 %v812, %v812
        %v2133 = vsel %vm1054, %v2101, 0.0
        %2134 = vadd.xlane.f32.xlu0 %v2133
        %v2135 = vpop.xlane.xlu0 %2134
        %v2136 = vsel %vm1054, %v2102, 0.0
        %2137 = vadd.xlane.f32.xlu0 %v2136
        %v2138 = vpop.xlane.xlu0 %2137
        %v2139 = vsel %vm1054, %v2103, 0.0
        %2140 = vadd.xlane.f32.xlu0 %v2139
        %v2141 = vpop.xlane.xlu0 %2140
        %v2142 = vsel %vm1054, %v2104, 0.0
        %2143 = vadd.xlane.f32.xlu0 %v2142
        %v2144 = vpop.xlane.xlu0 %2143
        %v2145 = vsel %vm1054, %v2105, 0.0
        %2146 = vadd.xlane.f32.xlu0 %v2145
        %v2147 = vpop.xlane.xlu0 %2146
        %v2148 = vsel %vm1054, %v2106, 0.0
        %2149 = vadd.xlane.f32.xlu0 %v2148
        %v2150 = vpop.xlane.xlu0 %2149
        %v2151 = vsel %vm1054, %v2107, 0.0
        %2152 = vadd.xlane.f32.xlu0 %v2151
        %v2153 = vpop.xlane.xlu0 %2152
        %v2154 = vsel %vm1054, %v2108, 0.0
        %2155 = vadd.xlane.f32.xlu0 %v2154
        %v2156 = vpop.xlane.xlu0 %2155
        %v2157 = vsel %vm1054, %v2109, 0.0
        %2158 = vadd.xlane.f32.xlu0 %v2157
        %v2159 = vpop.xlane.xlu0 %2158
        %v2160 = vsel %vm1054, %v2110, 0.0
        %2161 = vadd.xlane.f32.xlu0 %v2160
        %v2162 = vpop.xlane.xlu0 %2161
        %v2163 = vsel %vm1054, %v2111, 0.0
        %2164 = vadd.xlane.f32.xlu0 %v2163
        %v2165 = vpop.xlane.xlu0 %2164
        %v2166 = vsel %vm1054, %v2112, 0.0
        %2167 = vadd.xlane.f32.xlu0 %v2166
        %v2168 = vpop.xlane.xlu0 %2167
        %v2169 = vsel %vm1054, %v2113, 0.0
        %2170 = vadd.xlane.f32.xlu0 %v2169
        %v2171 = vpop.xlane.xlu0 %2170
        %v2172 = vsel %vm1054, %v2114, 0.0
        %2173 = vadd.xlane.f32.xlu0 %v2172
        %v2174 = vpop.xlane.xlu0 %2173
        %v2175 = vsel %vm1054, %v2115, 0.0
        %2176 = vadd.xlane.f32.xlu0 %v2175
        %v2177 = vpop.xlane.xlu0 %2176
        %v2178 = vsel %vm1054, %v2116, 0.0
        %2179 = vadd.xlane.f32.xlu0 %v2178
        %v2180 = vpop.xlane.xlu0 %2179
        %v2181 = vsel %vm1054, %v2117, 0.0
        %2182 = vadd.xlane.f32.xlu0 %v2181
        %v2183 = vpop.xlane.xlu0 %2182
        %v2184 = vsel %vm1054, %v2118, 0.0
        %2185 = vadd.xlane.f32.xlu0 %v2184
        %v2186 = vpop.xlane.xlu0 %2185
        %v2187 = vsel %vm1054, %v2119, 0.0
        %2188 = vadd.xlane.f32.xlu0 %v2187
        %v2189 = vpop.xlane.xlu0 %2188
        %v2190 = vsel %vm1054, %v2120, 0.0
        %2191 = vadd.xlane.f32.xlu0 %v2190
        %v2192 = vpop.xlane.xlu0 %2191
        %v2193 = vsel %vm1054, %v2121, 0.0
        %2194 = vadd.xlane.f32.xlu0 %v2193
        %v2195 = vpop.xlane.xlu0 %2194
        %v2196 = vsel %vm1054, %v2122, 0.0
        %2197 = vadd.xlane.f32.xlu0 %v2196
        %v2198 = vpop.xlane.xlu0 %2197
        %v2199 = vsel %vm1054, %v2123, 0.0
        %2200 = vadd.xlane.f32.xlu0 %v2199
        %v2201 = vpop.xlane.xlu0 %2200
        %v2202 = vsel %vm1054, %v2124, 0.0
        %2203 = vadd.xlane.f32.xlu0 %v2202
        %v2204 = vpop.xlane.xlu0 %2203
        %v2205 = vsel %vm1054, %v2125, 0.0
        %2206 = vadd.xlane.f32.xlu0 %v2205
        %v2207 = vpop.xlane.xlu0 %2206
        %v2208 = vsel %vm1054, %v2126, 0.0
        %2209 = vadd.xlane.f32.xlu0 %v2208
        %v2210 = vpop.xlane.xlu0 %2209
        %v2211 = vsel %vm1054, %v2127, 0.0
        %2212 = vadd.xlane.f32.xlu0 %v2211
        %v2213 = vpop.xlane.xlu0 %2212
        %v2214 = vsel %vm1054, %v2128, 0.0
        %2215 = vadd.xlane.f32.xlu0 %v2214
        %v2216 = vpop.xlane.xlu0 %2215
        %v2217 = vsel %vm1054, %v2129, 0.0
        %2218 = vadd.xlane.f32.xlu0 %v2217
        %v2219 = vpop.xlane.xlu0 %2218
        %v2220 = vsel %vm1054, %v2130, 0.0
        %2221 = vadd.xlane.f32.xlu0 %v2220
        %v2222 = vpop.xlane.xlu0 %2221
        %v2223 = vsel %vm1054, %v2131, 0.0
        %2224 = vadd.xlane.f32.xlu0 %v2223
        %v2225 = vpop.xlane.xlu0 %2224
        %v2226 = vsel %vm1054, %v2132, 0.0
        %2227 = vadd.xlane.f32.xlu0 %v2226
        %v2228 = vpop.xlane.xlu0 %2227
        %v2229 = vmul.f32 %v2135, 0.5
        %v2230 = vmul.f32 %v2138, 0.5
        %v2231 = vmul.f32 %v2141, 0.5
        %v2232 = vmul.f32 %v2144, 0.5
        %v2233 = vmul.f32 %v2147, 0.5
        %v2234 = vmul.f32 %v2150, 0.5
        %v2235 = vmul.f32 %v2153, 0.5
        %v2236 = vmul.f32 %v2156, 0.5
        %v2237 = vmul.f32 %v2159, 0.5
        %v2238 = vmul.f32 %v2162, 0.5
        %v2239 = vmul.f32 %v2165, 0.5
        %v2240 = vmul.f32 %v2168, 0.5
        %v2241 = vmul.f32 %v2171, 0.5
        %v2242 = vmul.f32 %v2174, 0.5
        %v2243 = vmul.f32 %v2177, 0.5
        %v2244 = vmul.f32 %v2180, 0.5
        %v2245 = vmul.f32 %v2183, 0.5
        %v2246 = vmul.f32 %v2186, 0.5
        %v2247 = vmul.f32 %v2189, 0.5
        %v2248 = vmul.f32 %v2192, 0.5
        %v2249 = vmul.f32 %v2195, 0.5
        %v2250 = vmul.f32 %v2198, 0.5
        %v2251 = vmul.f32 %v2201, 0.5
        %v2252 = vmul.f32 %v2204, 0.5
        %v2253 = vmul.f32 %v2207, 0.5
        %v2254 = vmul.f32 %v2210, 0.5
        %v2255 = vmul.f32 %v2213, 0.5
        %v2256 = vmul.f32 %v2216, 0.5
        %v2257 = vmul.f32 %v2219, 0.5
        %v2258 = vmul.f32 %v2222, 0.5
        %v2259 = vmul.f32 %v2225, 0.5
        %v2260 = vmul.f32 %v2228, 0.5
        %v2261 = vsub.f32 0.0, %v2229
        %v2262 = vsub.f32 0.0, %v2230
        %v2263 = vsub.f32 0.0, %v2231
        %v2264 = vsub.f32 0.0, %v2232
        %v2265 = vsub.f32 0.0, %v2233
        %v2266 = vsub.f32 0.0, %v2234
        %v2267 = vsub.f32 0.0, %v2235
        %v2268 = vsub.f32 0.0, %v2236
        %v2269 = vsub.f32 0.0, %v2237
        %v2270 = vsub.f32 0.0, %v2238
        %v2271 = vsub.f32 0.0, %v2239
        %v2272 = vsub.f32 0.0, %v2240
        %v2273 = vsub.f32 0.0, %v2241
        %v2274 = vsub.f32 0.0, %v2242
        %v2275 = vsub.f32 0.0, %v2243
        %v2276 = vsub.f32 0.0, %v2244
        %v2277 = vsub.f32 0.0, %v2245
        %v2278 = vsub.f32 0.0, %v2246
        %v2279 = vsub.f32 0.0, %v2247
        %v2280 = vsub.f32 0.0, %v2248
        %v2281 = vsub.f32 0.0, %v2249
        %v2282 = vsub.f32 0.0, %v2250
        %v2283 = vsub.f32 0.0, %v2251
        %v2284 = vsub.f32 0.0, %v2252
        %v2285 = vsub.f32 0.0, %v2253
        %v2286 = vsub.f32 0.0, %v2254
        %v2287 = vsub.f32 0.0, %v2255
        %v2288 = vsub.f32 0.0, %v2256
        %v2289 = vsub.f32 0.0, %v2257
        %v2290 = vsub.f32 0.0, %v2258
        %v2291 = vsub.f32 0.0, %v2259
        %v2292 = vsub.f32 0.0, %v2260
        %v2293 = vmul.f32 %v2261, 1.442695
        %v2294 = vpow.pop %v2293
        %v2295 = vmul.f32 %v2262, 1.442695
        %v2296 = vpow.pop %v2295
        %v2297 = vmul.f32 %v2263, 1.442695
        %v2298 = vpow.pop %v2297
        %v2299 = vmul.f32 %v2264, 1.442695
        %v2300 = vpow.pop %v2299
        %v2301 = vmul.f32 %v2265, 1.442695
        %v2302 = vpow.pop %v2301
        %v2303 = vmul.f32 %v2266, 1.442695
        %v2304 = vpow.pop %v2303
        %v2305 = vmul.f32 %v2267, 1.442695
        %v2306 = vpow.pop %v2305
        %v2307 = vmul.f32 %v2268, 1.442695
        %v2308 = vpow.pop %v2307
        %v2309 = vmul.f32 %v2269, 1.442695
        %v2310 = vpow.pop %v2309
        %v2311 = vmul.f32 %v2270, 1.442695
        %v2312 = vpow.pop %v2311
        %v2313 = vmul.f32 %v2271, 1.442695
        %v2314 = vpow.pop %v2313
        %v2315 = vmul.f32 %v2272, 1.442695
        %v2316 = vpow.pop %v2315
        %v2317 = vmul.f32 %v2273, 1.442695
        %v2318 = vpow.pop %v2317
        %v2319 = vmul.f32 %v2274, 1.442695
        %v2320 = vpow.pop %v2319
        %v2321 = vmul.f32 %v2275, 1.442695
        %v2322 = vpow.pop %v2321
        %v2323 = vmul.f32 %v2276, 1.442695
        %v2324 = vpow.pop %v2323
        %v2325 = vmul.f32 %v2277, 1.442695
        %v2326 = vpow.pop %v2325
        %v2327 = vmul.f32 %v2278, 1.442695
        %v2328 = vpow.pop %v2327
        %v2329 = vmul.f32 %v2279, 1.442695
        %v2330 = vpow.pop %v2329
        %v2331 = vmul.f32 %v2280, 1.442695
        %v2332 = vpow.pop %v2331
        %v2333 = vmul.f32 %v2281, 1.442695
        %v2334 = vpow.pop %v2333
        %v2335 = vmul.f32 %v2282, 1.442695
        %v2336 = vpow.pop %v2335
        %v2337 = vmul.f32 %v2283, 1.442695
        %v2338 = vpow.pop %v2337
        %v2339 = vmul.f32 %v2284, 1.442695
        %v2340 = vpow.pop %v2339
        %v2341 = vmul.f32 %v2285, 1.442695
        %v2342 = vpow.pop %v2341
        %v2343 = vmul.f32 %v2286, 1.442695
        %v2344 = vpow.pop %v2343
        %v2345 = vmul.f32 %v2287, 1.442695
        %v2346 = vpow.pop %v2345
        %v2347 = vmul.f32 %v2288, 1.442695
        %v2348 = vpow.pop %v2347
        %v2349 = vmul.f32 %v2289, 1.442695
        %v2350 = vpow.pop %v2349
        %v2351 = vmul.f32 %v2290, 1.442695
        %v2352 = vpow.pop %v2351
        %v2353 = vmul.f32 %v2291, 1.442695
        %v2354 = vpow.pop %v2353
        %v2355 = vmul.f32 %v2292, 1.442695
        %v2356 = vpow.pop %v2355
        %v2357 = vld [vmem:[#allocation2] sm:$0xff]
        %v2358 = vld [vmem:[#allocation2 + $0x8] sm:$0xff]
        %v2359 = vld [vmem:[#allocation2 + $0x10] sm:$0xff]
        %v2360 = vld [vmem:[#allocation2 + $0x18] sm:$0xff]
        %v2361 = vld [vmem:[#allocation2 + $0x20] sm:$0xff]
        %v2362 = vld [vmem:[#allocation2 + $0x28] sm:$0xff]
        %v2363 = vld [vmem:[#allocation2 + $0x30] sm:$0xff]
        %v2364 = vld [vmem:[#allocation2 + $0x38] sm:$0xff]
        %v2365 = vld [vmem:[#allocation2 + $0x40] sm:$0xff]
        %v2366 = vld [vmem:[#allocation2 + $0x48] sm:$0xff]
        %v2367 = vld [vmem:[#allocation2 + $0x50] sm:$0xff]
        %v2368 = vld [vmem:[#allocation2 + $0x58] sm:$0xff]
        %v2369 = vld [vmem:[#allocation2 + $0x60] sm:$0xff]
        %v2370 = vld [vmem:[#allocation2 + $0x68] sm:$0xff]
        %v2371 = vld [vmem:[#allocation2 + $0x70] sm:$0xff]
        %v2372 = vld [vmem:[#allocation2 + $0x78] sm:$0xff]
        %v2373 = vld [vmem:[#allocation2 + $0x80] sm:$0xff]
        %v2374 = vld [vmem:[#allocation2 + $0x88] sm:$0xff]
        %v2375 = vld [vmem:[#allocation2 + $0x90] sm:$0xff]
        %v2376 = vld [vmem:[#allocation2 + $0x98] sm:$0xff]
        %v2377 = vld [vmem:[#allocation2 + $0xa0] sm:$0xff]
        %v2378 = vld [vmem:[#allocation2 + $0xa8] sm:$0xff]
        %v2379 = vld [vmem:[#allocation2 + $0xb0] sm:$0xff]
        %v2380 = vld [vmem:[#allocation2 + $0xb8] sm:$0xff]
        %v2381 = vld [vmem:[#allocation2 + $0xc0] sm:$0xff]
        %v2382 = vld [vmem:[#allocation2 + $0xc8] sm:$0xff]
        %v2383 = vld [vmem:[#allocation2 + $0xd0] sm:$0xff]
        %v2384 = vld [vmem:[#allocation2 + $0xd8] sm:$0xff]
        %v2385 = vld [vmem:[#allocation2 + $0xe0] sm:$0xff]
        %v2386 = vld [vmem:[#allocation2 + $0xe8] sm:$0xff]
        %v2387 = vld [vmem:[#allocation2 + $0xf0] sm:$0xff]
        %v2388 = vld [vmem:[#allocation2 + $0xf8] sm:$0xff]
        %v2389 = vmul.f32 %v2294, %v2357
        %v2390 = vmul.f32 %v2296, %v2358
        %v2391 = vmul.f32 %v2298, %v2359
        %v2392 = vmul.f32 %v2300, %v2360
        %v2393 = vmul.f32 %v2302, %v2361
        %v2394 = vmul.f32 %v2304, %v2362
        %v2395 = vmul.f32 %v2306, %v2363
        %v2396 = vmul.f32 %v2308, %v2364
        %v2397 = vmul.f32 %v2310, %v2365
        %v2398 = vmul.f32 %v2312, %v2366
        %v2399 = vmul.f32 %v2314, %v2367
        %v2400 = vmul.f32 %v2316, %v2368
        %v2401 = vmul.f32 %v2318, %v2369
        %v2402 = vmul.f32 %v2320, %v2370
        %v2403 = vmul.f32 %v2322, %v2371
        %v2404 = vmul.f32 %v2324, %v2372
        %v2405 = vmul.f32 %v2326, %v2373
        %v2406 = vmul.f32 %v2328, %v2374
        %v2407 = vmul.f32 %v2330, %v2375
        %v2408 = vmul.f32 %v2332, %v2376
        %v2409 = vmul.f32 %v2334, %v2377
        %v2410 = vmul.f32 %v2336, %v2378
        %v2411 = vmul.f32 %v2338, %v2379
        %v2412 = vmul.f32 %v2340, %v2380
        %v2413 = vmul.f32 %v2342, %v2381
        %v2414 = vmul.f32 %v2344, %v2382
        %v2415 = vmul.f32 %v2346, %v2383
        %v2416 = vmul.f32 %v2348, %v2384
        %v2417 = vmul.f32 %v2350, %v2385
        %v2418 = vmul.f32 %v2352, %v2386
        %v2419 = vmul.f32 %v2354, %v2387
        %v2420 = vmul.f32 %v2356, %v2388
        %2421 = vst.msk [vmem:[%s466] sm:$0xff] %vm1054, %v2389
        %2422 = vst.msk [vmem:[%s466 + $0x8] sm:$0xff] %vm1054, %v2390
        %2423 = vst.msk [vmem:[%s466 + $0x10] sm:$0xff] %vm1054, %v2391
        %2424 = vst.msk [vmem:[%s466 + $0x18] sm:$0xff] %vm1054, %v2392
        %2425 = vst.msk [vmem:[%s466 + $0x20] sm:$0xff] %vm1054, %v2393
        %2426 = vst.msk [vmem:[%s466 + $0x28] sm:$0xff] %vm1054, %v2394
        %2427 = vst.msk [vmem:[%s466 + $0x30] sm:$0xff] %vm1054, %v2395
        %2428 = vst.msk [vmem:[%s466 + $0x38] sm:$0xff] %vm1054, %v2396
        %2429 = vst.msk [vmem:[%s466 + $0x40] sm:$0xff] %vm1054, %v2397
        %2430 = vst.msk [vmem:[%s466 + $0x48] sm:$0xff] %vm1054, %v2398
        %2431 = vst.msk [vmem:[%s466 + $0x50] sm:$0xff] %vm1054, %v2399
        %2432 = vst.msk [vmem:[%s466 + $0x58] sm:$0xff] %vm1054, %v2400
        %2433 = vst.msk [vmem:[%s466 + $0x60] sm:$0xff] %vm1054, %v2401
        %2434 = vst.msk [vmem:[%s466 + $0x68] sm:$0xff] %vm1054, %v2402
        %2435 = vst.msk [vmem:[%s466 + $0x70] sm:$0xff] %vm1054, %v2403
        %2436 = vst.msk [vmem:[%s466 + $0x78] sm:$0xff] %vm1054, %v2404
        %2437 = vst.msk [vmem:[%s466 + $0x80] sm:$0xff] %vm1054, %v2405
        %2438 = vst.msk [vmem:[%s466 + $0x88] sm:$0xff] %vm1054, %v2406
        %2439 = vst.msk [vmem:[%s466 + $0x90] sm:$0xff] %vm1054, %v2407
        %2440 = vst.msk [vmem:[%s466 + $0x98] sm:$0xff] %vm1054, %v2408
        %2441 = vst.msk [vmem:[%s466 + $0xa0] sm:$0xff] %vm1054, %v2409
        %2442 = vst.msk [vmem:[%s466 + $0xa8] sm:$0xff] %vm1054, %v2410
        %2443 = vst.msk [vmem:[%s466 + $0xb0] sm:$0xff] %vm1054, %v2411
        %2444 = vst.msk [vmem:[%s466 + $0xb8] sm:$0xff] %vm1054, %v2412
        %2445 = vst.msk [vmem:[%s466 + $0xc0] sm:$0xff] %vm1054, %v2413
        %2446 = vst.msk [vmem:[%s466 + $0xc8] sm:$0xff] %vm1054, %v2414
        %2447 = vst.msk [vmem:[%s466 + $0xd0] sm:$0xff] %vm1054, %v2415
        %2448 = vst.msk [vmem:[%s466 + $0xd8] sm:$0xff] %vm1054, %v2416
        %2449 = vst.msk [vmem:[%s466 + $0xe0] sm:$0xff] %vm1054, %v2417
        %2450 = vst.msk [vmem:[%s466 + $0xe8] sm:$0xff] %vm1054, %v2418
        %2451 = vst.msk [vmem:[%s466 + $0xf0] sm:$0xff] %vm1054, %v2419
        %2452 = vst.msk [vmem:[%s466 + $0xf8] sm:$0xff] %vm1054, %v2420
      $region48: #{tpu_custom_call.1} parent=39 // pred_fallthru
        _
      %s2453 = smul.u32 32, %s24
      %p2454 = scmp.lt.s32.totalorder %s22, 1
      %s2455 = scalar_select %p2454, %s22, 1
      %p2456 = scmp.lt.s32.totalorder %s23, 1
      %s2457 = scalar_select %p2456, %s23, 1
      %p2458 = scmp.lt.s32.totalorder %s2453, 63
      %s2459 = scalar_select %p2458, %s2453, 63
      %s2460 = smul.addr %s2457, 64
      %s2461 = sadd.s32 %s2459, %s2460
      %s2462 = smul.addr %s2455, 128
      %s2463 = sadd.s32 %s2461, %s2462
      %s2464 = smul.addr %s2463, 8
      %s2465 = scalar_lea.vmem %s5, %s2464
      // Predicated region
      $region49: #{tpu_custom_call.1} parent=39 // pred_check
        %p2466 = pneg %p210
      $region50: #{tpu_custom_call.1} parent=39 // pred_check_branch
        %2468 = sbr.rel (%p2466) target = $region52
      $region51: #{tpu_custom_call.1} parent=39 // pred_region
        %s2469 = smul.u32 32, %s24
      $region52: #{tpu_custom_call.1} parent=39 // pred_fallthru
        _
    $region40: #{tpu_custom_call.1} parent=5 // pred_fallthru
      _
    %p2470 = scmp.le.s32.totalorder 2, %s11
    // Predicated region
    $region53: #{tpu_custom_call.1} parent=5 // pred_check
      %p2471 = pneg %p2470
    $region54: #{tpu_custom_call.1} parent=5 // pred_check_branch
      %2473 = sbr.rel (%p2471) target = $region56
    $region55: #{tpu_custom_call.1} parent=5 // pred_region
      %s2474 = ssub.s32 %s11, 2
      // Predicated region
      $region57: #{tpu_custom_call.1} parent=55 // pred_check
        %p2475 = pneg %p216
      $region58: #{tpu_custom_call.1} parent=55 // pred_check_branch
        %2477 = sbr.rel (%p2475) target = $region60
      $region59: #{tpu_custom_call.1} parent=55 // pred_region
        %s2478 = smul.u32 32, %s28
        %p2479 = scmp.lt.s32.totalorder %s26, 1
        %s2480 = scalar_select %p2479, %s26, 1
        %p2481 = scmp.lt.s32.totalorder %s27, 1
        %s2482 = scalar_select %p2481, %s27, 1
        %p2483 = scmp.lt.s32.totalorder %s2478, 63
        %s2484 = scalar_select %p2483, %s2478, 63
        %s2485 = smul.addr %s2482, 64
        %s2486 = sadd.s32 %s2484, %s2485
        %s2487 = smul.addr %s2480, 128
        %s2488 = sadd.s32 %s2486, %s2487
        %s2489 = smul.addr %s2488, 8
        %s2490 = scalar_lea.vmem %s5, %s2489
      $region60: #{tpu_custom_call.1} parent=55 // pred_fallthru
        _
    $region56: #{tpu_custom_call.1} parent=5 // pred_fallthru
      _
  $region6: #{tpu_custom_call.1} parent=0 // loop_footer
    %s15 = sadd.s32 1, %s11
  $region7: #{tpu_custom_call.1} parent=0 // loop_footer_branch
    %10 = sbr.rel target = $region3
  $region8: #{tpu_custom_call.1} parent=0 // loop_exit
    _

</llo_original>
